<compile_context>
chip_gen: v5e
topology: v5e:2x2
jax: 0.10.0
libtpu: 0.0.40
codegen_flags: <defaults>
</compile_context>

<pallas_src>
import functools

import jax
import jax.numpy as jnp
from jax.experimental import pallas as pl
from jax.experimental.pallas import tpu as pltpu

EPS = 1e-5  # nn.BatchNorm1d default eps


# ------------------------------ kernel helpers ------------------------------ #
def _shifted(x, d):
    """out[:, l, :] = x[:, l + d, :], zero outside [0, L). Value-level, no scratch."""
    if d == 0:
        return x
    bt, L, C = x.shape
    z = jnp.zeros((bt, abs(d), C), x.dtype)
    if d > 0:
        return jnp.concatenate([x[:, d:, :], z], axis=1)
    return jnp.concatenate([z, x[:, :L + d, :]], axis=1)


def _conv_same_fused(x_bf16, w_flat, ksize):
    """'same' Conv1d over the whole-L tile as one MXU matmul (f32 accumulation).

    x_bf16: (bt, L, Ci) bf16; w_flat: (K*Ci, Co) bf16 with
    w_flat[k*Ci + i, o] == torch_weight[o, i, k].  Returns (bt, L, Co) f32.
    """
    bt, L, Ci = x_bf16.shape
    P = (ksize - 1) // 2
    taps = [_shifted(x_bf16, k - P) for k in range(ksize)]        # bf16 taps
    lhs = jnp.concatenate(taps, axis=-1).reshape(bt * L, ksize * Ci)
    y = jnp.dot(lhs, w_flat, preferred_element_type=jnp.float32)  # one MXU matmul
    return y.reshape(bt, L, w_flat.shape[-1])


# --------------------------------- kernels ----------------------------------- #
def _norm_conv_stats_kernel(scale_ref, off_ref, x_ref, w_ref,
                            y_ref, s_ref, ss_ref, *,
                            ksize, apply_affine, apply_relu, transpose_in):
    """[BN(prev layer, affine form) -> ReLU ->] conv -> accumulate this layer's stats."""
    @pl.when(pl.program_id(0) == 0)
    def _init():
        s_ref[...] = jnp.zeros_like(s_ref)
        ss_ref[...] = jnp.zeros_like(ss_ref)

    h = x_ref[...].astype(jnp.float32)
    if transpose_in:                      # fused NCL -> NLC relayout of the tile
        h = jnp.transpose(h, (0, 2, 1))
    if apply_affine:                      # previous layer's BatchNorm as scale/offset
        h = h * scale_ref[...] + off_ref[...]
    if apply_relu:
        h = jnp.maximum(h, 0.0)

    y = _conv_same_fused(h.astype(jnp.bfloat16), w_ref[...], ksize)  # (bt, L, Co) f32

    y_ref[...] = y.astype(y_ref.dtype)                               # bf16 to HBM
    s_ref[...] += jnp.sum(y, axis=(0, 1), keepdims=True)             # resident accum
    ss_ref[...] += jnp.sum(y * y, axis=(0, 1), keepdims=True)


def _norm_residual_kernel(scale_ref, off_ref, y_ref, x0_ref, out_ref):
    """BN3 (affine form) -> fused NLC->NCL relayout -> + residual -> f32 store."""
    h = y_ref[...].astype(jnp.float32) * scale_ref[...] + off_ref[...]
    h = jnp.transpose(h, (0, 2, 1))                       # (bt, L, C) -> (bt, C, L)
    out_ref[...] = h + x0_ref[...].astype(jnp.float32)


# ----------------------------- sizing / planning ----------------------------- #
def _vmem_capacity_bytes():
    try:
        return int(pltpu.get_tpu_info().vmem_capacity_bytes)
    except Exception:
        return 64 << 20            # conservative fallback: v7x per-TensorCore VMEM


def _per_step_vmem_bytes(bt, L, C, K):
    blk = bt * L * C
    stream = 2 * (blk * 4) + 2 * (blk * 2)     # double-buffered in (<=f32) + out (bf16)
    interm = blk * (4 + 2 + 2 * K + 4)         # h f32, h bf16, bf16 tap LHS, y f32
    weights = 2 * (K * C * C * 2)
    return stream + interm + weights + (2 << 20)


def _pick_batch_tile(N, L, C, K, budget):
    divisors = [d for d in range(1, N + 1) if N % d == 0]
    fitting = [d for d in divisors if _per_step_vmem_bytes(d, L, C, K) <= budget]
    if not fitting:
        return 1
    for d in fitting:                 # smallest tile giving >=512 MXU rows (v6e/v7x)
        if d * L >= 512:
            return d
    return fitting[0]                 # keep the grid long -> pipelining stays active


def _flatten_conv_weight(w):
    # PyTorch (Co, Ci, K) -> (K, Ci, Co) -> (K*Ci, Co) bf16 (MXU-native).
    co, ci, k = w.shape
    return jnp.transpose(w, (2, 1, 0)).reshape(k * ci, co).astype(jnp.bfloat16)


def _affine_from_stats(s, ss, count, gamma, beta):
    # Training-mode BatchNorm1d (biased variance).  Single-pass moments: documented
    # as numerically weaker than two-pass/Welford; fine at bf16-level tolerances.
    mean = s / count
    var = jnp.maximum(ss / count - mean * mean, 0.0)
    scale = gamma.reshape(1, 1, -1) * jax.lax.rsqrt(var + EPS)
    offset = beta.reshape(1, 1, -1) - mean * scale
    return scale, offset


# ---------------------------------- wrapper ---------------------------------- #
def init_params(key, cin, bottleneck=1, ksize=3):
    cmid = cin // bottleneck
    # NOTE: the PyTorch module applies BatchNorm1d(cmid) as norm3 on a cin-channel
    # tensor, which only works when cmid == cin (the default bottleneck=1).
    assert cmid == cin, "norm3=BatchNorm1d(cmid) requires cmid == cin"
    k1, k2, k3 = jax.random.split(key, 3)

    def conv_w(k, cout, cin_, ks):
        bound = (1.0 / (cin_ * ks)) ** 0.5           # PyTorch Conv1d default init
        return jax.random.uniform(k, (cout, cin_, ks), jnp.float32, -bound, bound)

    return dict(
        w1=conv_w(k1, cmid, cin, ksize),
        w2=conv_w(k2, cmid, cmid, ksize),
        w3=conv_w(k3, cin, cmid, ksize),
        g1=jnp.ones((cmid,), jnp.float32), b1=jnp.zeros((cmid,), jnp.float32),
        g2=jnp.ones((cmid,), jnp.float32), b2=jnp.zeros((cmid,), jnp.float32),
        g3=jnp.ones((cin,), jnp.float32), b3=jnp.zeros((cin,), jnp.float32),
    )


@functools.partial(jax.jit, static_argnames=("ksize",))
def resnet_block(x, params, ksize=3):
    # x: (N, C, L) -- PyTorch Conv1d layout; kernel internals use NLC, the
    # NCL<->NLC relayouts are fused into the first / last kernels.
    assert ksize % 2 == 1, "only odd ksize matches PyTorch padding='same' here"
    N, C, L = x.shape
    assert params["w1"].shape[0] == C, "norm3=BatchNorm1d(cmid) requires cmid == cin"

    w1 = _flatten_conv_weight(params["w1"])
    w2 = _flatten_conv_weight(params["w2"])
    w3 = _flatten_conv_weight(params["w3"])

    cap = _vmem_capacity_bytes()
    budget = cap - (12 << 20)                     # headroom for compiler scratch
    bt = _pick_batch_tile(N, L, C, ksize, budget)
    grid = (N // bt,)
    est = _per_step_vmem_bytes(bt, L, C, ksize)
    vmem_limit = int(min(budget, max(32 << 20, 2 * est)))

    ones = jnp.ones((1, 1, C), jnp.float32)
    zeros = jnp.zeros((1, 1, C), jnp.float32)

    def tile3(d1, d2):
        return pl.BlockSpec((bt, d1, d2), lambda n: (n, 0, 0))

    chan_spec = pl.BlockSpec((1, 1, C), lambda n: (0, 0, 0))
    w_spec = pl.BlockSpec((ksize * C, C), lambda n: (0, 0))

    def conv_stats_call(x_in, d1, d2, w, scale, off, *,
                        apply_affine, apply_relu, transpose_in):
        kern = functools.partial(_norm_conv_stats_kernel, ksize=ksize,
                                 apply_affine=apply_affine,
                                 apply_relu=apply_relu,
                                 transpose_in=transpose_in)
        return pl.pallas_call(
            kern,
            grid=grid,
            in_specs=[chan_spec, chan_spec, tile3(d1, d2), w_spec],
            out_specs=[tile3(L, C), chan_spec, chan_spec],
            out_shape=(jax.ShapeDtypeStruct((N, L, C), jnp.bfloat16),
                       jax.ShapeDtypeStruct((1, 1, C), jnp.float32),
                       jax.ShapeDtypeStruct((1, 1, C), jnp.float32)),
            compiler_params=pltpu.CompilerParams(
                dimension_semantics=("arbitrary",),   # BN stats accumulate over tiles
                vmem_limit_bytes=vmem_limit),
        )(scale, off, x_in, w)

    count = float(N * L)

    # layer 1: conv1 on raw input (fused NCL->NLC relayout) + stats1
    y1, s1, ss1 = conv_stats_call(x, C, L, w1, ones, zeros,
                                  apply_affine=False, apply_relu=False,
                                  transpose_in=True)
    sc1, of1 = _affine_from_stats(s1, ss1, count, params["g1"], params["b1"])

    # layer 2: BN1 + ReLU fused with conv2's LHS build + stats2
    y2, s2, ss2 = conv_stats_call(y1, L, C, w2, sc1, of1,
                                  apply_affine=True, apply_relu=True,
                                  transpose_in=False)
    sc2, of2 = _affine_from_stats(s2, ss2, count, params["g2"], params["b2"])

    # layer 3: BN2 + ReLU fused with conv3's LHS build + stats3
    y3, s3, ss3 = conv_stats_call(y2, L, C, w3, sc2, of2,
                                  apply_affine=True, apply_relu=True,
                                  transpose_in=False)
    sc3, of3 = _affine_from_stats(s3, ss3, count, params["g3"], params["b3"])

    # finalize: BN3 + residual, fused NLC->NCL relayout; stats-free -> "parallel"
    out = pl.pallas_call(
        _norm_residual_kernel,
        grid=grid,
        in_specs=[chan_spec, chan_spec, tile3(L, C), tile3(C, L)],
        out_specs=tile3(C, L),
        out_shape=jax.ShapeDtypeStruct((N, C, L), jnp.float32),
        compiler_params=pltpu.CompilerParams(
            dimension_semantics=("parallel",),        # v7x: shard across both TCs
            vmem_limit_bytes=vmem_limit),
    )(sc3, of3, y3, x)

    return out


# ----------------------------- pure-JAX reference ----------------------------- #
def resnet_block_ref(x, params):
    def conv1d_same(x, w):
        K = w.shape[-1]
        P = (K - 1) // 2
        L = x.shape[-1]
        xp = jnp.pad(x, ((0, 0), (0, 0), (P, P)))
        return sum(jnp.einsum("oi,nil->nol", w[:, :, k], xp[:, :, k:k + L])
                   for k in range(K))

    def bn(h, g, b):
        mean = jnp.mean(h, axis=(0, 2), keepdims=True)
        var = jnp.mean((h - mean) ** 2, axis=(0, 2), keepdims=True)
        return ((h - mean) * jax.lax.rsqrt(var + EPS)
                * g.reshape(1, -1, 1) + b.reshape(1, -1, 1))

    x0 = x
    h = jax.nn.relu(bn(conv1d_same(x, params["w1"]), params["g1"], params["b1"]))
    h = jax.nn.relu(bn(conv1d_same(h, params["w2"]), params["g2"], params["b2"]))
    h = bn(conv1d_same(h, params["w3"]), params["g3"], params["b3"])
    return h + x0


if __name__ == "__main__":
    key = jax.random.PRNGKey(0)
    kx, kp = jax.random.split(key)
    N, Cin, L = 2, 4, 16
    x = jax.random.normal(kx, (N, Cin, L), jnp.float32)
    params = init_params(kp, Cin, bottleneck=1, ksize=3)

    out = resnet_block(x, params)
    jax.block_until_ready(out)

    ref = resnet_block_ref(x, params)
    assert out.shape == (N, Cin, L)
    err = float(jnp.max(jnp.abs(out - ref)))
    # bf16 matmuls + bf16 intermediates (f32 accumulation / stats) vs all-f32 ref.
    assert jnp.allclose(out, ref, atol=5e-2, rtol=5e-2), err
    print("KERNEL_OK")
</pallas_src>

<mosaic_0001>
module attributes {stable_mosaic.version = 11 : i64} {
  func.func @_norm_residual_kernel(%arg0: i32, %arg1: memref<1x1x4xf32, #tpu.memory_space<vmem>>, %arg2: memref<1x1x4xf32, #tpu.memory_space<vmem>>, %arg3: memref<1x16x4xbf16, #tpu.memory_space<vmem>>, %arg4: memref<1x4x16xf32, #tpu.memory_space<vmem>>, %arg5: memref<1x4x16xf32, #tpu.memory_space<vmem>>) attributes {dimension_semantics = [#tpu.dimension_semantics<parallel>], iteration_bounds = array<i64: 2>, scalar_prefetch = 0 : i64, scratch_operands = 0 : i64, tpu.core_type = #tpu.core_type<tc>, window_params = [{pipeline_mode = #tpu.pipeline_mode<synchronous>, transform_indices = @transform_0, window_bounds = array<i64: 1, 1, 4>}, {pipeline_mode = #tpu.pipeline_mode<synchronous>, transform_indices = @transform_1, window_bounds = array<i64: 1, 1, 4>}, {transform_indices = @transform_2, window_bounds = array<i64: 1, 16, 4>}, {transform_indices = @transform_3, window_bounds = array<i64: 1, 4, 16>}, {transform_indices = @transform_4, window_bounds = array<i64: 1, 4, 16>}]} {
    %c0 = arith.constant 0 : index
    %c0_0 = arith.constant 0 : index
    %c0_1 = arith.constant 0 : index
    %0 = vector.load %arg3[%c0, %c0_0, %c0_1] : memref<1x16x4xbf16, #tpu.memory_space<vmem>>, vector<1x16x4xbf16>
    %1 = arith.extf %0 : vector<1x16x4xbf16> to vector<1x16x4xf32>
    %c0_2 = arith.constant 0 : index
    %c0_3 = arith.constant 0 : index
    %c0_4 = arith.constant 0 : index
    %2 = vector.load %arg1[%c0_2, %c0_3, %c0_4] : memref<1x1x4xf32, #tpu.memory_space<vmem>>, vector<1x1x4xf32>
    %3 = vector.broadcast %2 : vector<1x1x4xf32> to vector<1x16x4xf32>
    %4 = arith.mulf %1, %3 : vector<1x16x4xf32>
    %c0_5 = arith.constant 0 : index
    %c0_6 = arith.constant 0 : index
    %c0_7 = arith.constant 0 : index
    %5 = vector.load %arg2[%c0_5, %c0_6, %c0_7] : memref<1x1x4xf32, #tpu.memory_space<vmem>>, vector<1x1x4xf32>
    %6 = vector.broadcast %5 : vector<1x1x4xf32> to vector<1x16x4xf32>
    %7 = arith.addf %4, %6 : vector<1x16x4xf32>
    %8 = tpu.transpose %7, [0, 2, 1] : vector<1x16x4xf32> -> vector<1x4x16xf32>
    %c0_8 = arith.constant 0 : index
    %c0_9 = arith.constant 0 : index
    %c0_10 = arith.constant 0 : index
    %9 = vector.load %arg4[%c0_8, %c0_9, %c0_10] : memref<1x4x16xf32, #tpu.memory_space<vmem>>, vector<1x4x16xf32>
    %10 = arith.addf %8, %9 : vector<1x4x16xf32>
    %c0_11 = arith.constant 0 : index
    %c0_12 = arith.constant 0 : index
    %c0_13 = arith.constant 0 : index
    %11 = vector.load %arg5[%c0_11, %c0_12, %c0_13] : memref<1x4x16xf32, #tpu.memory_space<vmem>>, vector<1x4x16xf32>
    tpu.vector_store %arg5[%c0_11, %c0_12, %c0_13], %10 {strides = array<i32>} : memref<1x4x16xf32, #tpu.memory_space<vmem>>, vector<1x4x16xf32>,
    return
  }
  func.func @transform_0(%arg0: i32) -> (i32, i32, i32) {
    %c0_i32 = arith.constant 0 : i32
    %c0_i32_0 = arith.constant 0 : i32
    %c0_i32_1 = arith.constant 0 : i32
    %c0_i32_2 = arith.constant 0 : i32
    return %c0_i32, %c0_i32_0, %c0_i32_1 : i32, i32, i32
  }
  func.func @transform_1(%arg0: i32) -> (i32, i32, i32) {
    %c0_i32 = arith.constant 0 : i32
    %c0_i32_0 = arith.constant 0 : i32
    %c0_i32_1 = arith.constant 0 : i32
    %c0_i32_2 = arith.constant 0 : i32
    return %c0_i32, %c0_i32_0, %c0_i32_1 : i32, i32, i32
  }
  func.func @transform_2(%arg0: i32) -> (i32, i32, i32) {
    %c0_i32 = arith.constant 0 : i32
    %c0_i32_0 = arith.constant 0 : i32
    %c0_i32_1 = arith.constant 0 : i32
    return %arg0, %c0_i32, %c0_i32_0 : i32, i32, i32
  }
  func.func @transform_3(%arg0: i32) -> (i32, i32, i32) {
    %c0_i32 = arith.constant 0 : i32
    %c0_i32_0 = arith.constant 0 : i32
    %c0_i32_1 = arith.constant 0 : i32
    return %arg0, %c0_i32, %c0_i32_0 : i32, i32, i32
  }
  func.func @transform_4(%arg0: i32) -> (i32, i32, i32) {
    %c0_i32 = arith.constant 0 : i32
    %c0_i32_0 = arith.constant 0 : i32
    %c0_i32_1 = arith.constant 0 : i32
    return %arg0, %c0_i32, %c0_i32_0 : i32, i32, i32
  }
}

module attributes {stable_mosaic.version = 11 : i64} {
  func.func @_norm_conv_stats_kernel(%arg0: i32, %arg1: memref<1x1x4xf32, #tpu.memory_space<vmem>>, %arg2: memref<1x1x4xf32, #tpu.memory_space<vmem>>, %arg3: memref<1x4x16xf32, #tpu.memory_space<vmem>>, %arg4: memref<12x4xbf16, #tpu.memory_space<vmem>>, %arg5: memref<1x16x4xbf16, #tpu.memory_space<vmem>>, %arg6: memref<1x1x4xf32, #tpu.memory_space<vmem>>, %arg7: memref<1x1x4xf32, #tpu.memory_space<vmem>>) attributes {dimension_semantics = [#tpu.dimension_semantics<arbitrary>], iteration_bounds = array<i64: 2>, scalar_prefetch = 0 : i64, scratch_operands = 0 : i64, tpu.core_type = #tpu.core_type<tc>, window_params = [{pipeline_mode = #tpu.pipeline_mode<synchronous>, transform_indices = @transform_0, window_bounds = array<i64: 1, 1, 4>}, {pipeline_mode = #tpu.pipeline_mode<synchronous>, transform_indices = @transform_1, window_bounds = array<i64: 1, 1, 4>}, {transform_indices = @transform_2, window_bounds = array<i64: 1, 4, 16>}, {pipeline_mode = #tpu.pipeline_mode<synchronous>, transform_indices = @transform_3, window_bounds = array<i64: 12, 4>}, {transform_indices = @transform_4, window_bounds = array<i64: 1, 16, 4>}, {pipeline_mode = #tpu.pipeline_mode<synchronous>, transform_indices = @transform_5, window_bounds = array<i64: 1, 1, 4>}, {pipeline_mode = #tpu.pipeline_mode<synchronous>, transform_indices = @transform_6, window_bounds = array<i64: 1, 1, 4>}]} {
    %c0_i32 = arith.constant 0 : i32
    %0 = arith.cmpi eq, %arg0, %c0_i32 : i32
    %1 = arith.extui %0 : i1 to i32
    %c0_i32_0 = arith.constant 0 : i32
    %2 = arith.cmpi ne, %1, %c0_i32_0 : i32
    scf.if %2 {
      %cst_24 = arith.constant 0.000000e+00 : f32
      %30 = vector.broadcast %cst_24 : f32 to vector<1x1x4xf32>
      %c0_25 = arith.constant 0 : index
      %c0_26 = arith.constant 0 : index
      %c0_27 = arith.constant 0 : index
      %31 = vector.load %arg6[%c0_25, %c0_26, %c0_27] : memref<1x1x4xf32, #tpu.memory_space<vmem>>, vector<1x1x4xf32>
      tpu.vector_store %arg6[%c0_25, %c0_26, %c0_27], %30 {strides = array<i32>} : memref<1x1x4xf32, #tpu.memory_space<vmem>>, vector<1x1x4xf32>,
      %cst_28 = arith.constant 0.000000e+00 : f32
      %32 = vector.broadcast %cst_28 : f32 to vector<1x1x4xf32>
      %c0_29 = arith.constant 0 : index
      %c0_30 = arith.constant 0 : index
      %c0_31 = arith.constant 0 : index
      %33 = vector.load %arg7[%c0_29, %c0_30, %c0_31] : memref<1x1x4xf32, #tpu.memory_space<vmem>>, vector<1x1x4xf32>
      tpu.vector_store %arg7[%c0_29, %c0_30, %c0_31], %32 {strides = array<i32>} : memref<1x1x4xf32, #tpu.memory_space<vmem>>, vector<1x1x4xf32>,
    } else {
    }
    %c0 = arith.constant 0 : index
    %c0_1 = arith.constant 0 : index
    %c0_2 = arith.constant 0 : index
    %3 = vector.load %arg3[%c0, %c0_1, %c0_2] : memref<1x4x16xf32, #tpu.memory_space<vmem>>, vector<1x4x16xf32>
    %4 = tpu.transpose %3, [0, 2, 1] : vector<1x4x16xf32> -> vector<1x16x4xf32>
    %5 = arith.truncf %4 : vector<1x16x4xf32> to vector<1x16x4xbf16>
    %c0_3 = arith.constant 0 : index
    %c0_4 = arith.constant 0 : index
    %6 = vector.load %arg4[%c0_3, %c0_4] : memref<12x4xbf16, #tpu.memory_space<vmem>>, vector<12x4xbf16>
    %cst = arith.constant 0.000000e+00 : bf16
    %7 = vector.broadcast %cst : bf16 to vector<1x1x4xbf16>
    %8 = vector.extract_strided_slice %5 {offsets = [0, 0, 0], sizes = [1, 15, 4], strides = [1, 1, 1]} : vector<1x16x4xbf16> to vector<1x15x4xbf16>
    %9 = tpu.concatenate %7, %8 in 1 : vector<1x1x4xbf16>, vector<1x15x4xbf16> -> vector<1x16x4xbf16>
    %cst_5 = arith.constant 0.000000e+00 : bf16
    %10 = vector.broadcast %cst_5 : bf16 to vector<1x1x4xbf16>
    %11 = vector.extract_strided_slice %5 {offsets = [0, 1, 0], sizes = [1, 15, 4], strides = [1, 1, 1]} : vector<1x16x4xbf16> to vector<1x15x4xbf16>
    %12 = tpu.concatenate %11, %10 in 1 : vector<1x15x4xbf16>, vector<1x1x4xbf16> -> vector<1x16x4xbf16>
    %13 = tpu.concatenate %9, %5, %12 in 2 : vector<1x16x4xbf16>, vector<1x16x4xbf16>, vector<1x16x4xbf16> -> vector<1x16x12xbf16>
    %14 = vector.shape_cast %13 : vector<1x16x12xbf16> to vector<16x12xbf16>
    %cst_6 = arith.constant dense<0.000000e+00> : vector<16x4xf32>
    %15 = tpu.matmul %14, %6, %cst_6 {dimension_numbers = #tpu.dot_dimension_numbers<[1], [0], [0], [1], [0, 0, 1, 1], [], []>} : vector<16x12xbf16>, vector<12x4xbf16>, vector<16x4xf32> -> vector<16x4xf32>
    %16 = vector.shape_cast %15 : vector<16x4xf32> to vector<1x16x4xf32>
    %17 = arith.truncf %16 : vector<1x16x4xf32> to vector<1x16x4xbf16>
    %c0_7 = arith.constant 0 : index
    %c0_8 = arith.constant 0 : index
    %c0_9 = arith.constant 0 : index
    %18 = vector.load %arg5[%c0_7, %c0_8, %c0_9] : memref<1x16x4xbf16, #tpu.memory_space<vmem>>, vector<1x16x4xbf16>
    tpu.vector_store %arg5[%c0_7, %c0_8, %c0_9], %17 {strides = array<i32>} : memref<1x16x4xbf16, #tpu.memory_space<vmem>>, vector<1x16x4xbf16>,
    %c0_10 = arith.constant 0 : index
    %c0_11 = arith.constant 0 : index
    %c0_12 = arith.constant 0 : index
    %19 = vector.load %arg6[%c0_10, %c0_11, %c0_12] : memref<1x1x4xf32, #tpu.memory_space<vmem>>, vector<1x1x4xf32>
    %cst_13 = arith.constant dense<0.000000e+00> : vector<4xf32>
    %20 = vector.multi_reduction <add>, %16, %cst_13 [0, 1] : vector<1x16x4xf32> to vector<4xf32>
    %21 = vector.shape_cast %20 : vector<4xf32> to vector<1x1x4xf32>
    %22 = arith.addf %19, %21 : vector<1x1x4xf32>
    %c0_14 = arith.constant 0 : index
    %c0_15 = arith.constant 0 : index
    %c0_16 = arith.constant 0 : index
    %23 = vector.load %arg6[%c0_14, %c0_15, %c0_16] : memref<1x1x4xf32, #tpu.memory_space<vmem>>, vector<1x1x4xf32>
    tpu.vector_store %arg6[%c0_14, %c0_15, %c0_16], %22 {strides = array<i32>} : memref<1x1x4xf32, #tpu.memory_space<vmem>>, vector<1x1x4xf32>,
    %c0_17 = arith.constant 0 : index
    %c0_18 = arith.constant 0 : index
    %c0_19 = arith.constant 0 : index
    %24 = vector.load %arg7[%c0_17, %c0_18, %c0_19] : memref<1x1x4xf32, #tpu.memory_space<vmem>>, vector<1x1x4xf32>
    %25 = arith.mulf %16, %16 : vector<1x16x4xf32>
    %cst_20 = arith.constant dense<0.000000e+00> : vector<4xf32>
    %26 = vector.multi_reduction <add>, %25, %cst_20 [0, 1] : vector<1x16x4xf32> to vector<4xf32>
    %27 = vector.shape_cast %26 : vector<4xf32> to vector<1x1x4xf32>
    %28 = arith.addf %24, %27 : vector<1x1x4xf32>
    %c0_21 = arith.constant 0 : index
    %c0_22 = arith.constant 0 : index
    %c0_23 = arith.constant 0 : index
    %29 = vector.load %arg7[%c0_21, %c0_22, %c0_23] : memref<1x1x4xf32, #tpu.memory_space<vmem>>, vector<1x1x4xf32>
    tpu.vector_store %arg7[%c0_21, %c0_22, %c0_23], %28 {strides = array<i32>} : memref<1x1x4xf32, #tpu.memory_space<vmem>>, vector<1x1x4xf32>,
    return
  }
  func.func @transform_0(%arg0: i32) -> (i32, i32, i32) {
    %c0_i32 = arith.constant 0 : i32
    %c0_i32_0 = arith.constant 0 : i32
    %c0_i32_1 = arith.constant 0 : i32
    %c0_i32_2 = arith.constant 0 : i32
    return %c0_i32, %c0_i32_0, %c0_i32_1 : i32, i32, i32
  }
  func.func @transform_1(%arg0: i32) -> (i32, i32, i32) {
    %c0_i32 = arith.constant 0 : i32
    %c0_i32_0 = arith.constant 0 : i32
    %c0_i32_1 = arith.constant 0 : i32
    %c0_i32_2 = arith.constant 0 : i32
    return %c0_i32, %c0_i32_0, %c0_i32_1 : i32, i32, i32
  }
  func.func @transform_2(%arg0: i32) -> (i32, i32, i32) {
    %c0_i32 = arith.constant 0 : i32
    %c0_i32_0 = arith.constant 0 : i32
    %c0_i32_1 = arith.constant 0 : i32
    return %arg0, %c0_i32, %c0_i32_0 : i32, i32, i32
  }
  func.func @transform_3(%arg0: i32) -> (i32, i32) {
    %c0_i32 = arith.constant 0 : i32
    %c0_i32_0 = arith.constant 0 : i32
    %c0_i32_1 = arith.constant 0 : i32
    return %c0_i32, %c0_i32_0 : i32, i32
  }
  func.func @transform_4(%arg0: i32) -> (i32, i32, i32) {
    %c0_i32 = arith.constant 0 : i32
    %c0_i32_0 = arith.constant 0 : i32
    %c0_i32_1 = arith.constant 0 : i32
    return %arg0, %c0_i32, %c0_i32_0 : i32, i32, i32
  }
  func.func @transform_5(%arg0: i32) -> (i32, i32, i32) {
    %c0_i32 = arith.constant 0 : i32
    %c0_i32_0 = arith.constant 0 : i32
    %c0_i32_1 = arith.constant 0 : i32
    %c0_i32_2 = arith.constant 0 : i32
    return %c0_i32, %c0_i32_0, %c0_i32_1 : i32, i32, i32
  }
  func.func @transform_6(%arg0: i32) -> (i32, i32, i32) {
    %c0_i32 = arith.constant 0 : i32
    %c0_i32_0 = arith.constant 0 : i32
    %c0_i32_1 = arith.constant 0 : i32
    %c0_i32_2 = arith.constant 0 : i32
    return %c0_i32, %c0_i32_0, %c0_i32_1 : i32, i32, i32
  }
}

module attributes {stable_mosaic.version = 11 : i64} {
  func.func @_norm_conv_stats_kernel(%arg0: i32, %arg1: memref<1x1x4xf32, #tpu.memory_space<vmem>>, %arg2: memref<1x1x4xf32, #tpu.memory_space<vmem>>, %arg3: memref<1x16x4xbf16, #tpu.memory_space<vmem>>, %arg4: memref<12x4xbf16, #tpu.memory_space<vmem>>, %arg5: memref<1x16x4xbf16, #tpu.memory_space<vmem>>, %arg6: memref<1x1x4xf32, #tpu.memory_space<vmem>>, %arg7: memref<1x1x4xf32, #tpu.memory_space<vmem>>) attributes {dimension_semantics = [#tpu.dimension_semantics<arbitrary>], iteration_bounds = array<i64: 2>, scalar_prefetch = 0 : i64, scratch_operands = 0 : i64, tpu.core_type = #tpu.core_type<tc>, window_params = [{pipeline_mode = #tpu.pipeline_mode<synchronous>, transform_indices = @transform_0, window_bounds = array<i64: 1, 1, 4>}, {pipeline_mode = #tpu.pipeline_mode<synchronous>, transform_indices = @transform_1, window_bounds = array<i64: 1, 1, 4>}, {transform_indices = @transform_2, window_bounds = array<i64: 1, 16, 4>}, {pipeline_mode = #tpu.pipeline_mode<synchronous>, transform_indices = @transform_3, window_bounds = array<i64: 12, 4>}, {transform_indices = @transform_4, window_bounds = array<i64: 1, 16, 4>}, {pipeline_mode = #tpu.pipeline_mode<synchronous>, transform_indices = @transform_5, window_bounds = array<i64: 1, 1, 4>}, {pipeline_mode = #tpu.pipeline_mode<synchronous>, transform_indices = @transform_6, window_bounds = array<i64: 1, 1, 4>}]} {
    %c0_i32 = arith.constant 0 : i32
    %0 = arith.cmpi eq, %arg0, %c0_i32 : i32
    %1 = arith.extui %0 : i1 to i32
    %c0_i32_0 = arith.constant 0 : i32
    %2 = arith.cmpi ne, %1, %c0_i32_0 : i32
    scf.if %2 {
      %cst_31 = arith.constant 0.000000e+00 : f32
      %38 = vector.broadcast %cst_31 : f32 to vector<1x1x4xf32>
      %c0_32 = arith.constant 0 : index
      %c0_33 = arith.constant 0 : index
      %c0_34 = arith.constant 0 : index
      %39 = vector.load %arg6[%c0_32, %c0_33, %c0_34] : memref<1x1x4xf32, #tpu.memory_space<vmem>>, vector<1x1x4xf32>
      tpu.vector_store %arg6[%c0_32, %c0_33, %c0_34], %38 {strides = array<i32>} : memref<1x1x4xf32, #tpu.memory_space<vmem>>, vector<1x1x4xf32>,
      %cst_35 = arith.constant 0.000000e+00 : f32
      %40 = vector.broadcast %cst_35 : f32 to vector<1x1x4xf32>
      %c0_36 = arith.constant 0 : index
      %c0_37 = arith.constant 0 : index
      %c0_38 = arith.constant 0 : index
      %41 = vector.load %arg7[%c0_36, %c0_37, %c0_38] : memref<1x1x4xf32, #tpu.memory_space<vmem>>, vector<1x1x4xf32>
      tpu.vector_store %arg7[%c0_36, %c0_37, %c0_38], %40 {strides = array<i32>} : memref<1x1x4xf32, #tpu.memory_space<vmem>>, vector<1x1x4xf32>,
    } else {
    }
    %c0 = arith.constant 0 : index
    %c0_1 = arith.constant 0 : index
    %c0_2 = arith.constant 0 : index
    %3 = vector.load %arg3[%c0, %c0_1, %c0_2] : memref<1x16x4xbf16, #tpu.memory_space<vmem>>, vector<1x16x4xbf16>
    %4 = arith.extf %3 : vector<1x16x4xbf16> to vector<1x16x4xf32>
    %c0_3 = arith.constant 0 : index
    %c0_4 = arith.constant 0 : index
    %c0_5 = arith.constant 0 : index
    %5 = vector.load %arg1[%c0_3, %c0_4, %c0_5] : memref<1x1x4xf32, #tpu.memory_space<vmem>>, vector<1x1x4xf32>
    %6 = vector.broadcast %5 : vector<1x1x4xf32> to vector<1x16x4xf32>
    %7 = arith.mulf %4, %6 : vector<1x16x4xf32>
    %c0_6 = arith.constant 0 : index
    %c0_7 = arith.constant 0 : index
    %c0_8 = arith.constant 0 : index
    %8 = vector.load %arg2[%c0_6, %c0_7, %c0_8] : memref<1x1x4xf32, #tpu.memory_space<vmem>>, vector<1x1x4xf32>
    %9 = vector.broadcast %8 : vector<1x1x4xf32> to vector<1x16x4xf32>
    %10 = arith.addf %7, %9 : vector<1x16x4xf32>
    %cst = arith.constant 0.000000e+00 : f32
    %11 = vector.broadcast %cst : f32 to vector<1x16x4xf32>
    %12 = arith.maximumf %10, %11 : vector<1x16x4xf32>
    %13 = arith.truncf %12 : vector<1x16x4xf32> to vector<1x16x4xbf16>
    %c0_9 = arith.constant 0 : index
    %c0_10 = arith.constant 0 : index
    %14 = vector.load %arg4[%c0_9, %c0_10] : memref<12x4xbf16, #tpu.memory_space<vmem>>, vector<12x4xbf16>
    %cst_11 = arith.constant 0.000000e+00 : bf16
    %15 = vector.broadcast %cst_11 : bf16 to vector<1x1x4xbf16>
    %16 = vector.extract_strided_slice %13 {offsets = [0, 0, 0], sizes = [1, 15, 4], strides = [1, 1, 1]} : vector<1x16x4xbf16> to vector<1x15x4xbf16>
    %17 = tpu.concatenate %15, %16 in 1 : vector<1x1x4xbf16>, vector<1x15x4xbf16> -> vector<1x16x4xbf16>
    %cst_12 = arith.constant 0.000000e+00 : bf16
    %18 = vector.broadcast %cst_12 : bf16 to vector<1x1x4xbf16>
    %19 = vector.extract_strided_slice %13 {offsets = [0, 1, 0], sizes = [1, 15, 4], strides = [1, 1, 1]} : vector<1x16x4xbf16> to vector<1x15x4xbf16>
    %20 = tpu.concatenate %19, %18 in 1 : vector<1x15x4xbf16>, vector<1x1x4xbf16> -> vector<1x16x4xbf16>
    %21 = tpu.concatenate %17, %13, %20 in 2 : vector<1x16x4xbf16>, vector<1x16x4xbf16>, vector<1x16x4xbf16> -> vector<1x16x12xbf16>
    %22 = vector.shape_cast %21 : vector<1x16x12xbf16> to vector<16x12xbf16>
    %cst_13 = arith.constant dense<0.000000e+00> : vector<16x4xf32>
    %23 = tpu.matmul %22, %14, %cst_13 {dimension_numbers = #tpu.dot_dimension_numbers<[1], [0], [0], [1], [0, 0, 1, 1], [], []>} : vector<16x12xbf16>, vector<12x4xbf16>, vector<16x4xf32> -> vector<16x4xf32>
    %24 = vector.shape_cast %23 : vector<16x4xf32> to vector<1x16x4xf32>
    %25 = arith.truncf %24 : vector<1x16x4xf32> to vector<1x16x4xbf16>
    %c0_14 = arith.constant 0 : index
    %c0_15 = arith.constant 0 : index
    %c0_16 = arith.constant 0 : index
    %26 = vector.load %arg5[%c0_14, %c0_15, %c0_16] : memref<1x16x4xbf16, #tpu.memory_space<vmem>>, vector<1x16x4xbf16>
    tpu.vector_store %arg5[%c0_14, %c0_15, %c0_16], %25 {strides = array<i32>} : memref<1x16x4xbf16, #tpu.memory_space<vmem>>, vector<1x16x4xbf16>,
    %c0_17 = arith.constant 0 : index
    %c0_18 = arith.constant 0 : index
    %c0_19 = arith.constant 0 : index
    %27 = vector.load %arg6[%c0_17, %c0_18, %c0_19] : memref<1x1x4xf32, #tpu.memory_space<vmem>>, vector<1x1x4xf32>
    %cst_20 = arith.constant dense<0.000000e+00> : vector<4xf32>
    %28 = vector.multi_reduction <add>, %24, %cst_20 [0, 1] : vector<1x16x4xf32> to vector<4xf32>
    %29 = vector.shape_cast %28 : vector<4xf32> to vector<1x1x4xf32>
    %30 = arith.addf %27, %29 : vector<1x1x4xf32>
    %c0_21 = arith.constant 0 : index
    %c0_22 = arith.constant 0 : index
    %c0_23 = arith.constant 0 : index
    %31 = vector.load %arg6[%c0_21, %c0_22, %c0_23] : memref<1x1x4xf32, #tpu.memory_space<vmem>>, vector<1x1x4xf32>
    tpu.vector_store %arg6[%c0_21, %c0_22, %c0_23], %30 {strides = array<i32>} : memref<1x1x4xf32, #tpu.memory_space<vmem>>, vector<1x1x4xf32>,
    %c0_24 = arith.constant 0 : index
    %c0_25 = arith.constant 0 : index
    %c0_26 = arith.constant 0 : index
    %32 = vector.load %arg7[%c0_24, %c0_25, %c0_26] : memref<1x1x4xf32, #tpu.memory_space<vmem>>, vector<1x1x4xf32>
    %33 = arith.mulf %24, %24 : vector<1x16x4xf32>
    %cst_27 = arith.constant dense<0.000000e+00> : vector<4xf32>
    %34 = vector.multi_reduction <add>, %33, %cst_27 [0, 1] : vector<1x16x4xf32> to vector<4xf32>
    %35 = vector.shape_cast %34 : vector<4xf32> to vector<1x1x4xf32>
    %36 = arith.addf %32, %35 : vector<1x1x4xf32>
    %c0_28 = arith.constant 0 : index
    %c0_29 = arith.constant 0 : index
    %c0_30 = arith.constant 0 : index
    %37 = vector.load %arg7[%c0_28, %c0_29, %c0_30] : memref<1x1x4xf32, #tpu.memory_space<vmem>>, vector<1x1x4xf32>
    tpu.vector_store %arg7[%c0_28, %c0_29, %c0_30], %36 {strides = array<i32>} : memref<1x1x4xf32, #tpu.memory_space<vmem>>, vector<1x1x4xf32>,
    return
  }
  func.func @transform_0(%arg0: i32) -> (i32, i32, i32) {
    %c0_i32 = arith.constant 0 : i32
    %c0_i32_0 = arith.constant 0 : i32
    %c0_i32_1 = arith.constant 0 : i32
    %c0_i32_2 = arith.constant 0 : i32
    return %c0_i32, %c0_i32_0, %c0_i32_1 : i32, i32, i32
  }
  func.func @transform_1(%arg0: i32) -> (i32, i32, i32) {
    %c0_i32 = arith.constant 0 : i32
    %c0_i32_0 = arith.constant 0 : i32
    %c0_i32_1 = arith.constant 0 : i32
    %c0_i32_2 = arith.constant 0 : i32
    return %c0_i32, %c0_i32_0, %c0_i32_1 : i32, i32, i32
  }
  func.func @transform_2(%arg0: i32) -> (i32, i32, i32) {
    %c0_i32 = arith.constant 0 : i32
    %c0_i32_0 = arith.constant 0 : i32
    %c0_i32_1 = arith.constant 0 : i32
    return %arg0, %c0_i32, %c0_i32_0 : i32, i32, i32
  }
  func.func @transform_3(%arg0: i32) -> (i32, i32) {
    %c0_i32 = arith.constant 0 : i32
    %c0_i32_0 = arith.constant 0 : i32
    %c0_i32_1 = arith.constant 0 : i32
    return %c0_i32, %c0_i32_0 : i32, i32
  }
  func.func @transform_4(%arg0: i32) -> (i32, i32, i32) {
    %c0_i32 = arith.constant 0 : i32
    %c0_i32_0 = arith.constant 0 : i32
    %c0_i32_1 = arith.constant 0 : i32
    return %arg0, %c0_i32, %c0_i32_0 : i32, i32, i32
  }
  func.func @transform_5(%arg0: i32) -> (i32, i32, i32) {
    %c0_i32 = arith.constant 0 : i32
    %c0_i32_0 = arith.constant 0 : i32
    %c0_i32_1 = arith.constant 0 : i32
    %c0_i32_2 = arith.constant 0 : i32
    return %c0_i32, %c0_i32_0, %c0_i32_1 : i32, i32, i32
  }
  func.func @transform_6(%arg0: i32) -> (i32, i32, i32) {
    %c0_i32 = arith.constant 0 : i32
    %c0_i32_0 = arith.constant 0 : i32
    %c0_i32_1 = arith.constant 0 : i32
    %c0_i32_2 = arith.constant 0 : i32
    return %c0_i32, %c0_i32_0, %c0_i32_1 : i32, i32, i32
  }
}

</mosaic_0001>

<llo_original>
// kernel: resnet_block.7
$region0: #{resnet_block.7}
  #allocation0 [shape = 'u32[]', space=smem, size = 0x4, offset = 0x4, fixed_abs, tag = 'smem constant byte address 0x4 - core index']
  #allocation1 [shape = 'u32[72,128]{1,0:T(1,128)}', space=vmem, size = 0x9000, scoped, tag = 'internal scratch']
  %s0 = inlined_call_operand.vmem [shape: f32[1,1,4], index: 0, kind: input, shape index: {}]
  %s1 = inlined_call_operand.vmem [shape: f32[1,1,4], index: 1, kind: input, shape index: {}]
  %s2 = inlined_call_operand.vmem [shape: bf16[2,16,4], index: 2, kind: input, shape index: {}]
  %s3 = inlined_call_operand.vmem [shape: f32[2,4,16], index: 3, kind: input, shape index: {}]
  %s4 = inlined_call_operand.hbm [shape: f32[2,4,16], index: 4, kind: output, shape index: {}]
  %s5 = sld [smem:[#allocation0]]
  $region49: #{resnet_block.7} parent=0
    _
  %s7 = ssub.s32 1, %s5
  %s8 = scalar_select 0, %s7, %s5
  $region1: #{resnet_block.7} parent=0
    #allocation2 [shape = 'u8[4096]{0}', space=vmem, size = 0x1000, scoped, tag = 'output window, operand 0']
    #allocation3 [shape = 's32[2]{0}', space=sflag, size = 0x8, scoped, tag = 'scoped memory for resnet_block.7']
    %9 = vsyncpa [#allocation3], 0
    %s10 = scalar_lea.sflag [#allocation3], 1
    %11 = vsyncpa %s10, 0
    loop: start=0, step=1, limit=4
    $region2: #{resnet_block.7} parent=1 // loop_pre_header
      _
    $region3: #{resnet_block.7} parent=1 // loop_header
      %s13 = sphi 0, %s17
      %p14 = scmp.ge.s32.totalorder %s13, 4
      %s21 = sphi 0, %s21
      %s23 = sphi 0, %s21
      %s24 = sphi 0, %s23
      %s38 = sphi 0, %s24
      %s42 = sphi 0, %s42
      %s44 = sphi 0, %s42
      %s45 = sphi 0, %s44
      %s59 = sphi 0, %s45
      %s65 = sphi 0, %s67
      %s68 = sphi 0, %s65
      %s69 = sphi 0, %s68
      %s85 = sphi 0, %s69
      %s91 = sphi 0, %s93
      %s94 = sphi 0, %s91
      %s95 = sphi 0, %s94
      %s111 = sphi 0, %s95
      %s117 = sphi 0, %s119
      %s120 = sphi 0, %s117
      %s121 = sphi 0, %s120
      %s137 = sphi 0, %s121
    $region4: #{resnet_block.7} parent=1 // loop_header_branch
      %16 = sbr.rel (%p14) target = $region8
    $region5: #{resnet_block.7} parent=1 // loop_body
      %s18 = ssub.s32 %s13, 1
      %s19 = ssub.s32 %s13, 2
      %s20 = sadd.s32 %s13, 1
      %s22 = sadd.s32 %s21, 1
      %p25 = scmp.eq.s32.totalorder %s13, 1
      %p26 = scmp.ne.s32.totalorder %s21, %s23
      %p27 = scmp.eq.s32.totalorder %s13, 0
      %p28 = por %p26, %p27
      %p29 = scmp.ne.s32.totalorder %s21, %s23
      %p30 = scmp.eq.s32.totalorder %s18, 1
      %p31 = por %p29, %p30
      %p32 = scmp.ne.s32.totalorder %s23, %s24
      %p33 = scmp.eq.s32.totalorder %s18, 0
      %p34 = por %p32, %p33
      %p35 = scmp.ne.s32.totalorder %s23, %s24
      %p36 = scmp.eq.s32.totalorder %s19, 1
      %p37 = por %p35, %p36
      %p39 = scmp.ne.s32.totalorder %s24, %s38
      %p40 = scmp.eq.s32.totalorder %s19, 0
      %p41 = por %p39, %p40
      %s43 = sadd.s32 %s42, 1
      %p46 = scmp.eq.s32.totalorder %s13, 1
      %p47 = scmp.ne.s32.totalorder %s42, %s44
      %p48 = scmp.eq.s32.totalorder %s13, 0
      %p49 = por %p47, %p48
      %p50 = scmp.ne.s32.totalorder %s42, %s44
      %p51 = scmp.eq.s32.totalorder %s18, 1
      %p52 = por %p50, %p51
      %p53 = scmp.ne.s32.totalorder %s44, %s45
      %p54 = scmp.eq.s32.totalorder %s18, 0
      %p55 = por %p53, %p54
      %p56 = scmp.ne.s32.totalorder %s44, %s45
      %p57 = scmp.eq.s32.totalorder %s19, 1
      %p58 = por %p56, %p57
      %p60 = scmp.ne.s32.totalorder %s45, %s59
      %p61 = scmp.eq.s32.totalorder %s19, 0
      %p62 = por %p60, %p61
      %s63 = ssub.s32 %s13, %s20
      %p64 = scmp.eq.s32.totalorder %s63, 0
      %s66 = sadd.s32 %s65, 1
      %s67 = scalar_select %p64, %s65, %s66
      %p70 = pneg %p64
      %p71 = scmp.eq.s32.totalorder %s13, 1
      %p72 = por %p70, %p71
      %p73 = scmp.ne.s32.totalorder %s65, %s68
      %p74 = scmp.eq.s32.totalorder %s13, 0
      %p75 = por %p73, %p74
      %p76 = scmp.ne.s32.totalorder %s65, %s68
      %p77 = scmp.eq.s32.totalorder %s18, 1
      %p78 = por %p76, %p77
      %p79 = scmp.ne.s32.totalorder %s68, %s69
      %p80 = scmp.eq.s32.totalorder %s18, 0
      %p81 = por %p79, %p80
      %p82 = scmp.ne.s32.totalorder %s68, %s69
      %p83 = scmp.eq.s32.totalorder %s19, 1
      %p84 = por %p82, %p83
      %p86 = scmp.ne.s32.totalorder %s69, %s85
      %p87 = scmp.eq.s32.totalorder %s19, 0
      %p88 = por %p86, %p87
      %s89 = ssub.s32 %s13, %s20
      %p90 = scmp.eq.s32.totalorder %s89, 0
      %s92 = sadd.s32 %s91, 1
      %s93 = scalar_select %p90, %s91, %s92
      %p96 = pneg %p90
      %p97 = scmp.eq.s32.totalorder %s13, 1
      %p98 = por %p96, %p97
      %p99 = scmp.ne.s32.totalorder %s91, %s94
      %p100 = scmp.eq.s32.totalorder %s13, 0
      %p101 = por %p99, %p100
      %p102 = scmp.ne.s32.totalorder %s91, %s94
      %p103 = scmp.eq.s32.totalorder %s18, 1
      %p104 = por %p102, %p103
      %p105 = scmp.ne.s32.totalorder %s94, %s95
      %p106 = scmp.eq.s32.totalorder %s18, 0
      %p107 = por %p105, %p106
      %p108 = scmp.ne.s32.totalorder %s94, %s95
      %p109 = scmp.eq.s32.totalorder %s19, 1
      %p110 = por %p108, %p109
      %p112 = scmp.ne.s32.totalorder %s95, %s111
      %p113 = scmp.eq.s32.totalorder %s19, 0
      %p114 = por %p112, %p113
      %s115 = ssub.s32 %s13, %s20
      %p116 = scmp.eq.s32.totalorder %s115, 0
      %s118 = sadd.s32 %s117, 1
      %s119 = scalar_select %p116, %s117, %s118
      %p122 = pneg %p116
      %p123 = scmp.eq.s32.totalorder %s13, 1
      %p124 = por %p122, %p123
      %p125 = scmp.ne.s32.totalorder %s117, %s120
      %p126 = scmp.eq.s32.totalorder %s13, 0
      %p127 = por %p125, %p126
      %p128 = scmp.ne.s32.totalorder %s117, %s120
      %p129 = scmp.eq.s32.totalorder %s18, 1
      %p130 = por %p128, %p129
      %p131 = scmp.ne.s32.totalorder %s120, %s121
      %p132 = scmp.eq.s32.totalorder %s18, 0
      %p133 = por %p131, %p132
      %p134 = scmp.ne.s32.totalorder %s120, %s121
      %p135 = scmp.eq.s32.totalorder %s19, 1
      %p136 = por %p134, %p135
      %p138 = scmp.ne.s32.totalorder %s121, %s137
      %p139 = scmp.eq.s32.totalorder %s19, 0
      %p140 = por %p138, %p139
      %p141 = scmp.le.s32.totalorder 1, %s13
      %p142 = scmp.lt.s32.totalorder %s13, 3
      %p143 = pnand %p141, %p142
      %p144 = pneg %p143
      // Predicated region
      $region9: #{resnet_block.7} parent=5 // pred_check
        _
      $region10: #{resnet_block.7} parent=5 // pred_check_branch
        %146 = sbr.rel (%p143) target = $region12
      $region11: #{resnet_block.7} parent=5 // pred_region
        %s147 = ssub.s32 %s13, 1
        // Predicated region
        $region13: #{resnet_block.7} parent=11 // pred_check
          %p148 = pneg %p34
        $region14: #{resnet_block.7} parent=11 // pred_check_branch
          %150 = sbr.rel (%p148) target = $region16
        $region15: #{resnet_block.7} parent=11 // pred_region
          _
        $region16: #{resnet_block.7} parent=11 // pred_fallthru
          _
        // Predicated region
        $region17: #{resnet_block.7} parent=11 // pred_check
          %p151 = pneg %p55
        $region18: #{resnet_block.7} parent=11 // pred_check_branch
          %153 = sbr.rel (%p151) target = $region20
        $region19: #{resnet_block.7} parent=11 // pred_region
          _
        $region20: #{resnet_block.7} parent=11 // pred_fallthru
          _
      $region12: #{resnet_block.7} parent=5 // pred_fallthru
        _
      %p154 = scmp.lt.s32.totalorder %s13, 2
      // Predicated region
      $region21: #{resnet_block.7} parent=5 // pred_check
        %p155 = pneg %p154
      $region22: #{resnet_block.7} parent=5 // pred_check_branch
        %157 = sbr.rel (%p155) target = $region24
      $region23: #{resnet_block.7} parent=5 // pred_region
        // Predicated region
        $region25: #{resnet_block.7} parent=23 // pred_check
          %p158 = pneg %p75
        $region26: #{resnet_block.7} parent=23 // pred_check_branch
          %160 = sbr.rel (%p158) target = $region28
        $region27: #{resnet_block.7} parent=23 // pred_region
          %p161 = scmp.lt.s32.totalorder %s13, 1
          %s162 = scalar_select %p161, %s13, 1
          %s163 = smul.addr %s162, 2
          %s164 = smul.addr %s163, 4
          %s165 = scalar_lea.vmem %s2, %s164
        $region28: #{resnet_block.7} parent=23 // pred_fallthru
          _
        // Predicated region
        $region29: #{resnet_block.7} parent=23 // pred_check
          %p166 = pneg %p101
        $region30: #{resnet_block.7} parent=23 // pred_check_branch
          %168 = sbr.rel (%p166) target = $region32
        $region31: #{resnet_block.7} parent=23 // pred_region
          %p169 = scmp.lt.s32.totalorder %s13, 1
          %s170 = scalar_select %p169, %s13, 1
          %s171 = smul.addr %s170, 4
          %s172 = scalar_lea.vmem %s3, %s171
        $region32: #{resnet_block.7} parent=23 // pred_fallthru
          _
      $region24: #{resnet_block.7} parent=5 // pred_fallthru
        _
      %p173 = scmp.le.s32.totalorder 1, %s13
      %p174 = scmp.lt.s32.totalorder %s13, 3
      %p175 = pnand %p173, %p174
      %p176 = pneg %p175
      // Predicated region
      $region33: #{resnet_block.7} parent=5 // pred_check
        _
      $region34: #{resnet_block.7} parent=5 // pred_check_branch
        %178 = sbr.rel (%p175) target = $region36
      $region35: #{resnet_block.7} parent=5 // pred_region
        %s179 = ssub.s32 %s13, 1
        %p180 = pneg %p34
        %p181 = pneg %p31
        %p182 = pneg %p55
        %p183 = pneg %p52
        %p184 = scmp.lt.s32.totalorder %s18, 1
        %s185 = scalar_select %p184, %s18, 1
        %s186 = smul.addr %s185, 2
        %s187 = smul.addr %s186, 4
        %s188 = scalar_lea.vmem %s2, %s187
        %p189 = pneg %p81
        %p190 = pneg %p78
        %p191 = scmp.lt.s32.totalorder %s18, 1
        %s192 = scalar_select %p191, %s18, 1
        %s193 = smul.addr %s192, 4
        %s194 = scalar_lea.vmem %s3, %s193
        %p195 = pneg %p107
        %p196 = pneg %p104
        %p197 = pneg %p133
        %p198 = pneg %p130
        %s199 = sand.u32 %s120, 1
        %s200 = scalar_lea.sflag [#allocation3], %s199
        %s201 = sand.u32 %s120, 1
        %s202 = smul.addr %s201, 4
        %s203 = scalar_lea.vmem [#allocation2], %s202
        %p204 = scmp.lt.s32.totalorder %s18, 1
        %s205 = scalar_select %p204, %s18, 1
        %s206 = smul.addr %s205, 2
        %s207 = smul.addr %s206, 4
        %s208 = scalar_lea.vmem %s2, %s207
        %p209 = scmp.lt.s32.totalorder %s18, 1
        %s210 = scalar_select %p209, %s18, 1
        %s211 = smul.addr %s210, 4
        %s212 = scalar_lea.vmem %s3, %s211
        %v213 = vld [vmem:[%s208] sm:$0xf]
        %v214 = vld [vmem:[%s208 + $0x4] sm:$0xf]
        %v215 = vunpack.c.l.bf16 %v213
        %v216 = vunpack.c.l.bf16 %v214
        %v217 = vld [vmem:[%s0] sm:$0x1]
        %v219 = vperm.slane %v217, 0
        %v221 = vmul.f32 %v215, %v219
        %v222 = vmul.f32 %v216, %v219
        %v223 = vld [vmem:[%s1] sm:$0x1]
        %v225 = vperm.slane %v223, 0
        %v227 = vadd.f32 %v221, %v225
        %v228 = vadd.f32 %v222, %v225
        %229 = vxpose.xlu0.b32.start [1/16] %v227, 128
        %230 = vxpose.xlu0.b32.cont [2/16] %v228, 128
        %231 = vxpose.xlu0.b32.cont [3/16] 0.0, 128
        %232 = vxpose.xlu0.b32.cont [4/16] 0.0, 128
        %233 = vxpose.xlu0.b32.cont [5/16] 0.0, 128
        %234 = vxpose.xlu0.b32.cont [6/16] 0.0, 128
        %235 = vxpose.xlu0.b32.cont [7/16] 0.0, 128
        %236 = vxpose.xlu0.b32.cont [8/16] 0.0, 128
        %237 = vxpose.xlu0.b32.cont [9/16] 0.0, 128
        %238 = vxpose.xlu0.b32.cont [10/16] 0.0, 128
        %239 = vxpose.xlu0.b32.cont [11/16] 0.0, 128
        %240 = vxpose.xlu0.b32.cont [12/16] 0.0, 128
        %241 = vxpose.xlu0.b32.cont [13/16] 0.0, 128
        %242 = vxpose.xlu0.b32.cont [14/16] 0.0, 128
        %243 = vxpose.xlu0.b32.cont [15/16] 0.0, 128
        %244 = vxpose.xlu0.b32.end [16/16] 0.0, 128
        %v245 = vpop.trf.xlu0
        %v246 = vpop.trf.xlu0
        %v247 = vpop.trf.xlu0
        %v248 = vpop.trf.xlu0
        %v249 = vpop.trf.xlu0
        %v250 = vpop.trf.xlu0
        %v251 = vpop.trf.xlu0
        %v252 = vpop.trf.xlu0
        %v253 = vpop.trf.xlu0
        %v254 = vpop.trf.xlu0
        %v255 = vpop.trf.xlu0
        %v256 = vpop.trf.xlu0
        %v257 = vpop.trf.xlu0
        %v258 = vpop.trf.xlu0
        %v259 = vpop.trf.xlu0
        %v260 = vpop.trf.xlu0
        %v261 = vld [vmem:[%s212] sm:$0xf]
        %v262 = vadd.f32 %v245, %v261
        %vm263 = vcmask 125952
        %264 = vst.msk [vmem:[%s203] sm:$0xf] %vm263, %v262
        %s265 = sand.u32 %s120, 1
        %s266 = scalar_lea.sflag [#allocation3], %s265
        %s267 = sand.u32 %s120, 1
        %s268 = smul.addr %s267, 4
        %s269 = scalar_lea.vmem [#allocation2], %s268
        // Predicated region
        $region37: #{resnet_block.7} parent=35 // pred_check
          %p270 = pneg %p130
        $region38: #{resnet_block.7} parent=35 // pred_check_branch
          %272 = sbr.rel (%p270) target = $region40
        $region39: #{resnet_block.7} parent=35 // pred_region
          %274 = vsyncadd %s266, 0
          %s275 = smul.addr %s18, 4
          %s276 = scalar_lea.hbm %s4, %s275
          %s278 = sshll.u32 %s269, 4
          %s279 = int_to_ptr.vmem [resolvable:$true] %s278
          %s280 = sshll.u32 %s276, 4
          %s281 = int_to_ptr.hbm [resolvable:$true] %s280
          %283 = dma.vmem_to_hbm [thread:$0]  %s279, 64, %s281, %s266
        $region40: #{resnet_block.7} parent=35 // pred_fallthru
          _
      $region36: #{resnet_block.7} parent=5 // pred_fallthru
        _
      %p284 = scmp.le.s32.totalorder 2, %s13
      // Predicated region
      $region41: #{resnet_block.7} parent=5 // pred_check
        %p285 = pneg %p284
      $region42: #{resnet_block.7} parent=5 // pred_check_branch
        %287 = sbr.rel (%p285) target = $region44
      $region43: #{resnet_block.7} parent=5 // pred_region
        %s288 = ssub.s32 %s13, 2
        // Predicated region
        $region45: #{resnet_block.7} parent=43 // pred_check
          %p289 = pneg %p136
        $region46: #{resnet_block.7} parent=43 // pred_check_branch
          %291 = sbr.rel (%p289) target = $region48
        $region47: #{resnet_block.7} parent=43 // pred_region
          %s292 = sand.u32 %s121, 1
          %s293 = scalar_lea.sflag [#allocation3], %s292
          %s294 = sand.u32 %s121, 1
          %s295 = smul.addr %s294, 4
          %s296 = scalar_lea.vmem [#allocation2], %s295
          %298 = dma.done %s293, 64
        $region48: #{resnet_block.7} parent=43 // pred_fallthru
          _
      $region44: #{resnet_block.7} parent=5 // pred_fallthru
        _
    $region6: #{resnet_block.7} parent=1 // loop_footer
      %s17 = sadd.s32 1, %s13
    $region7: #{resnet_block.7} parent=1 // loop_footer_branch
      %12 = sbr.rel target = $region3
    $region8: #{resnet_block.7} parent=1 // loop_exit
      _
    %299 = vsyncpa [#allocation3], 1
    %s300 = scalar_lea.sflag [#allocation3], 1
    %301 = vsyncpa %s300, 1

// kernel: resnet_block.5
$region0: #{resnet_block.5}
  #allocation0 [shape = 'u32[]', space=smem, size = 0x4, offset = 0x4, fixed_abs, tag = 'smem constant byte address 0x4 - core index']
  #allocation1 [shape = 'u32[72,128]{1,0:T(1,128)}', space=vmem, size = 0x9000, scoped, tag = 'internal scratch']
  %s0 = inlined_call_operand.vmem [shape: f32[1,1,4], index: 0, kind: input, shape index: {}]
  %s1 = inlined_call_operand.vmem [shape: f32[1,1,4], index: 1, kind: input, shape index: {}]
  %s2 = inlined_call_operand.vmem [shape: bf16[2,16,4], index: 2, kind: input, shape index: {}]
  %s3 = inlined_call_operand.vmem [shape: bf16[12,4], index: 3, kind: input, shape index: {}]
  %s4 = inlined_call_operand.vmem [shape: bf16[2,16,4], index: 4, kind: output, shape index: {0}]
  %s5 = inlined_call_operand.vmem [shape: f32[1,1,4], index: 5, kind: output, shape index: {1}]
  %s6 = inlined_call_operand.vmem [shape: f32[1,1,4], index: 6, kind: output, shape index: {2}]
  %7 = xla_tuple %s4, %s5, %s6
  %s8 = sld [smem:[#allocation0]]
  $region69: #{resnet_block.5} parent=0
    _
  %s10 = ssub.s32 1, %s8
  %s11 = scalar_select 0, %s10, %s8
  loop: start=0, step=1, limit=4
  $region2: #{resnet_block.5} parent=0 // loop_pre_header
    _
  $region3: #{resnet_block.5} parent=0 // loop_header
    %s13 = sphi 0, %s17
    %p14 = scmp.ge.s32.totalorder %s13, 4
    %s21 = sphi 0, %s21
    %s23 = sphi 0, %s21
    %s24 = sphi 0, %s23
    %s38 = sphi 0, %s24
    %s42 = sphi 0, %s42
    %s44 = sphi 0, %s42
    %s45 = sphi 0, %s44
    %s59 = sphi 0, %s45
    %s65 = sphi 0, %s67
    %s68 = sphi 0, %s65
    %s69 = sphi 0, %s68
    %s85 = sphi 0, %s69
    %s89 = sphi 0, %s89
    %s91 = sphi 0, %s89
    %s92 = sphi 0, %s91
    %s106 = sphi 0, %s92
    %s112 = sphi 0, %s114
    %s115 = sphi 0, %s112
    %s116 = sphi 0, %s115
    %s132 = sphi 0, %s116
    %s136 = sphi 0, %s136
    %s138 = sphi 0, %s136
    %s139 = sphi 0, %s138
    %s153 = sphi 0, %s139
    %s157 = sphi 0, %s157
    %s159 = sphi 0, %s157
    %s160 = sphi 0, %s159
    %s174 = sphi 0, %s160
  $region4: #{resnet_block.5} parent=0 // loop_header_branch
    %16 = sbr.rel (%p14) target = $region8
  $region5: #{resnet_block.5} parent=0 // loop_body
    %s18 = ssub.s32 %s13, 1
    %s19 = ssub.s32 %s13, 2
    %s20 = sadd.s32 %s13, 1
    %s22 = sadd.s32 %s21, 1
    %p25 = scmp.eq.s32.totalorder %s13, 1
    %p26 = scmp.ne.s32.totalorder %s21, %s23
    %p27 = scmp.eq.s32.totalorder %s13, 0
    %p28 = por %p26, %p27
    %p29 = scmp.ne.s32.totalorder %s21, %s23
    %p30 = scmp.eq.s32.totalorder %s18, 1
    %p31 = por %p29, %p30
    %p32 = scmp.ne.s32.totalorder %s23, %s24
    %p33 = scmp.eq.s32.totalorder %s18, 0
    %p34 = por %p32, %p33
    %p35 = scmp.ne.s32.totalorder %s23, %s24
    %p36 = scmp.eq.s32.totalorder %s19, 1
    %p37 = por %p35, %p36
    %p39 = scmp.ne.s32.totalorder %s24, %s38
    %p40 = scmp.eq.s32.totalorder %s19, 0
    %p41 = por %p39, %p40
    %s43 = sadd.s32 %s42, 1
    %p46 = scmp.eq.s32.totalorder %s13, 1
    %p47 = scmp.ne.s32.totalorder %s42, %s44
    %p48 = scmp.eq.s32.totalorder %s13, 0
    %p49 = por %p47, %p48
    %p50 = scmp.ne.s32.totalorder %s42, %s44
    %p51 = scmp.eq.s32.totalorder %s18, 1
    %p52 = por %p50, %p51
    %p53 = scmp.ne.s32.totalorder %s44, %s45
    %p54 = scmp.eq.s32.totalorder %s18, 0
    %p55 = por %p53, %p54
    %p56 = scmp.ne.s32.totalorder %s44, %s45
    %p57 = scmp.eq.s32.totalorder %s19, 1
    %p58 = por %p56, %p57
    %p60 = scmp.ne.s32.totalorder %s45, %s59
    %p61 = scmp.eq.s32.totalorder %s19, 0
    %p62 = por %p60, %p61
    %s63 = ssub.s32 %s13, %s20
    %p64 = scmp.eq.s32.totalorder %s63, 0
    %s66 = sadd.s32 %s65, 1
    %s67 = scalar_select %p64, %s65, %s66
    %p70 = pneg %p64
    %p71 = scmp.eq.s32.totalorder %s13, 1
    %p72 = por %p70, %p71
    %p73 = scmp.ne.s32.totalorder %s65, %s68
    %p74 = scmp.eq.s32.totalorder %s13, 0
    %p75 = por %p73, %p74
    %p76 = scmp.ne.s32.totalorder %s65, %s68
    %p77 = scmp.eq.s32.totalorder %s18, 1
    %p78 = por %p76, %p77
    %p79 = scmp.ne.s32.totalorder %s68, %s69
    %p80 = scmp.eq.s32.totalorder %s18, 0
    %p81 = por %p79, %p80
    %p82 = scmp.ne.s32.totalorder %s68, %s69
    %p83 = scmp.eq.s32.totalorder %s19, 1
    %p84 = por %p82, %p83
    %p86 = scmp.ne.s32.totalorder %s69, %s85
    %p87 = scmp.eq.s32.totalorder %s19, 0
    %p88 = por %p86, %p87
    %s90 = sadd.s32 %s89, 1
    %p93 = scmp.eq.s32.totalorder %s13, 1
    %p94 = scmp.ne.s32.totalorder %s89, %s91
    %p95 = scmp.eq.s32.totalorder %s13, 0
    %p96 = por %p94, %p95
    %p97 = scmp.ne.s32.totalorder %s89, %s91
    %p98 = scmp.eq.s32.totalorder %s18, 1
    %p99 = por %p97, %p98
    %p100 = scmp.ne.s32.totalorder %s91, %s92
    %p101 = scmp.eq.s32.totalorder %s18, 0
    %p102 = por %p100, %p101
    %p103 = scmp.ne.s32.totalorder %s91, %s92
    %p104 = scmp.eq.s32.totalorder %s19, 1
    %p105 = por %p103, %p104
    %p107 = scmp.ne.s32.totalorder %s92, %s106
    %p108 = scmp.eq.s32.totalorder %s19, 0
    %p109 = por %p107, %p108
    %s110 = ssub.s32 %s13, %s20
    %p111 = scmp.eq.s32.totalorder %s110, 0
    %s113 = sadd.s32 %s112, 1
    %s114 = scalar_select %p111, %s112, %s113
    %p117 = pneg %p111
    %p118 = scmp.eq.s32.totalorder %s13, 1
    %p119 = por %p117, %p118
    %p120 = scmp.ne.s32.totalorder %s112, %s115
    %p121 = scmp.eq.s32.totalorder %s13, 0
    %p122 = por %p120, %p121
    %p123 = scmp.ne.s32.totalorder %s112, %s115
    %p124 = scmp.eq.s32.totalorder %s18, 1
    %p125 = por %p123, %p124
    %p126 = scmp.ne.s32.totalorder %s115, %s116
    %p127 = scmp.eq.s32.totalorder %s18, 0
    %p128 = por %p126, %p127
    %p129 = scmp.ne.s32.totalorder %s115, %s116
    %p130 = scmp.eq.s32.totalorder %s19, 1
    %p131 = por %p129, %p130
    %p133 = scmp.ne.s32.totalorder %s116, %s132
    %p134 = scmp.eq.s32.totalorder %s19, 0
    %p135 = por %p133, %p134
    %s137 = sadd.s32 %s136, 1
    %p140 = scmp.eq.s32.totalorder %s13, 1
    %p141 = scmp.ne.s32.totalorder %s136, %s138
    %p142 = scmp.eq.s32.totalorder %s13, 0
    %p143 = por %p141, %p142
    %p144 = scmp.ne.s32.totalorder %s136, %s138
    %p145 = scmp.eq.s32.totalorder %s18, 1
    %p146 = por %p144, %p145
    %p147 = scmp.ne.s32.totalorder %s138, %s139
    %p148 = scmp.eq.s32.totalorder %s18, 0
    %p149 = por %p147, %p148
    %p150 = scmp.ne.s32.totalorder %s138, %s139
    %p151 = scmp.eq.s32.totalorder %s19, 1
    %p152 = por %p150, %p151
    %p154 = scmp.ne.s32.totalorder %s139, %s153
    %p155 = scmp.eq.s32.totalorder %s19, 0
    %p156 = por %p154, %p155
    %s158 = sadd.s32 %s157, 1
    %p161 = scmp.eq.s32.totalorder %s13, 1
    %p162 = scmp.ne.s32.totalorder %s157, %s159
    %p163 = scmp.eq.s32.totalorder %s13, 0
    %p164 = por %p162, %p163
    %p165 = scmp.ne.s32.totalorder %s157, %s159
    %p166 = scmp.eq.s32.totalorder %s18, 1
    %p167 = por %p165, %p166
    %p168 = scmp.ne.s32.totalorder %s159, %s160
    %p169 = scmp.eq.s32.totalorder %s18, 0
    %p170 = por %p168, %p169
    %p171 = scmp.ne.s32.totalorder %s159, %s160
    %p172 = scmp.eq.s32.totalorder %s19, 1
    %p173 = por %p171, %p172
    %p175 = scmp.ne.s32.totalorder %s160, %s174
    %p176 = scmp.eq.s32.totalorder %s19, 0
    %p177 = por %p175, %p176
    %p178 = scmp.le.s32.totalorder 1, %s13
    %p179 = scmp.lt.s32.totalorder %s13, 3
    %p180 = pnand %p178, %p179
    %p181 = pneg %p180
    // Predicated region
    $region9: #{resnet_block.5} parent=5 // pred_check
      _
    $region10: #{resnet_block.5} parent=5 // pred_check_branch
      %183 = sbr.rel (%p180) target = $region12
    $region11: #{resnet_block.5} parent=5 // pred_region
      %s184 = ssub.s32 %s13, 1
      // Predicated region
      $region13: #{resnet_block.5} parent=11 // pred_check
        %p185 = pneg %p34
      $region14: #{resnet_block.5} parent=11 // pred_check_branch
        %187 = sbr.rel (%p185) target = $region16
      $region15: #{resnet_block.5} parent=11 // pred_region
        _
      $region16: #{resnet_block.5} parent=11 // pred_fallthru
        _
      // Predicated region
      $region17: #{resnet_block.5} parent=11 // pred_check
        %p188 = pneg %p55
      $region18: #{resnet_block.5} parent=11 // pred_check_branch
        %190 = sbr.rel (%p188) target = $region20
      $region19: #{resnet_block.5} parent=11 // pred_region
        _
      $region20: #{resnet_block.5} parent=11 // pred_fallthru
        _
      // Predicated region
      $region21: #{resnet_block.5} parent=11 // pred_check
        %p191 = pneg %p102
      $region22: #{resnet_block.5} parent=11 // pred_check_branch
        %193 = sbr.rel (%p191) target = $region24
      $region23: #{resnet_block.5} parent=11 // pred_region
        _
      $region24: #{resnet_block.5} parent=11 // pred_fallthru
        _
    $region12: #{resnet_block.5} parent=5 // pred_fallthru
      _
    %p194 = scmp.lt.s32.totalorder %s13, 2
    // Predicated region
    $region25: #{resnet_block.5} parent=5 // pred_check
      %p195 = pneg %p194
    $region26: #{resnet_block.5} parent=5 // pred_check_branch
      %197 = sbr.rel (%p195) target = $region28
    $region27: #{resnet_block.5} parent=5 // pred_region
      // Predicated region
      $region29: #{resnet_block.5} parent=27 // pred_check
        %p198 = pneg %p75
      $region30: #{resnet_block.5} parent=27 // pred_check_branch
        %200 = sbr.rel (%p198) target = $region32
      $region31: #{resnet_block.5} parent=27 // pred_region
        %p201 = scmp.lt.s32.totalorder %s13, 1
        %s202 = scalar_select %p201, %s13, 1
        %s203 = smul.addr %s202, 2
        %s204 = smul.addr %s203, 4
        %s205 = scalar_lea.vmem %s2, %s204
      $region32: #{resnet_block.5} parent=27 // pred_fallthru
        _
    $region28: #{resnet_block.5} parent=5 // pred_fallthru
      _
    %p206 = scmp.le.s32.totalorder 1, %s13
    %p207 = scmp.lt.s32.totalorder %s13, 3
    %p208 = pnand %p206, %p207
    %p209 = pneg %p208
    // Predicated region
    $region33: #{resnet_block.5} parent=5 // pred_check
      _
    $region34: #{resnet_block.5} parent=5 // pred_check_branch
      %211 = sbr.rel (%p208) target = $region36
    $region35: #{resnet_block.5} parent=5 // pred_region
      %s212 = ssub.s32 %s13, 1
      %p213 = pneg %p34
      %p214 = pneg %p31
      %p215 = pneg %p55
      %p216 = pneg %p52
      %p217 = scmp.lt.s32.totalorder %s18, 1
      %s218 = scalar_select %p217, %s18, 1
      %s219 = smul.addr %s218, 2
      %s220 = smul.addr %s219, 4
      %s221 = scalar_lea.vmem %s2, %s220
      %p222 = pneg %p81
      %p223 = pneg %p78
      %p224 = pneg %p102
      %p225 = pneg %p99
      %p226 = pneg %p128
      %p227 = pneg %p125
      %p228 = scmp.lt.s32.totalorder %s18, 1
      %s229 = scalar_select %p228, %s18, 1
      %s230 = smul.addr %s229, 2
      %s231 = smul.addr %s230, 4
      %s232 = scalar_lea.vmem %s4, %s231
      %p233 = pneg %p149
      %p234 = pneg %p146
      %p235 = pneg %p170
      %p236 = pneg %p167
      %p237 = scmp.lt.s32.totalorder %s18, 1
      %s238 = scalar_select %p237, %s18, 1
      %s239 = smul.addr %s238, 2
      %s240 = smul.addr %s239, 4
      %s241 = scalar_lea.vmem %s2, %s240
      %p242 = scmp.lt.s32.totalorder %s18, 1
      %s243 = scalar_select %p242, %s18, 1
      %s244 = smul.addr %s243, 2
      %s245 = smul.addr %s244, 4
      %s246 = scalar_lea.vmem %s4, %s245
      %p248 = scmp.eq.s32.totalorder %s18, 0
      // Predicated region
      $region37: #{resnet_block.5} parent=35 // pred_check
        %p249 = pneg %p248
      $region38: #{resnet_block.5} parent=35 // pred_check_branch
        %251 = sbr.rel (%p249) target = $region40
      $region39: #{resnet_block.5} parent=35 // pred_region
        %vm252 = vcmask 24576
        %253 = vst.msk [vmem:[%s5] sm:$0x1] %vm252, 0.0
        %254 = vst.msk [vmem:[%s6] sm:$0x1] %vm252, 0.0
      $region40: #{resnet_block.5} parent=35 // pred_fallthru
        _
      %v255 = vld [vmem:[%s241] sm:$0xf]
      %v256 = vld [vmem:[%s241 + $0x4] sm:$0xf]
      %v257 = vunpack.c.l.bf16 %v255
      %v258 = vunpack.c.l.bf16 %v256
      %v259 = vld [vmem:[%s0] sm:$0x1]
      %v261 = vperm.slane %v259, 0
      %v263 = vmul.f32 %v257, %v261
      %v264 = vmul.f32 %v258, %v261
      %v265 = vld [vmem:[%s1] sm:$0x1]
      %v267 = vperm.slane %v265, 0
      %v269 = vadd.f32 %v263, %v267
      %v270 = vadd.f32 %v264, %v267
      %v271 = vmax.f32 %v269, 0.0
      %v272 = vmax.f32 %v270, 0.0
      %v273 = vpack.c.bf16 %v271, %v271
      %v274 = vpack.c.bf16 %v272, %v272
      %v275 = vld [vmem:[%s3] sm:$0xf]
      %v276 = vld [vmem:[%s3 + $0x4] sm:$0x3]
      %v279 = vunpack.c.l.b16 %v273
      %v280 = vunpack.c.l.b16 %v274
      %v281 = vpack.c.b16 %v280, %v279
      %v283 = vshrl.u32 %v281, 16
      %v285 = vrot.slane %v283, 7
      %v286 = vshll.u32 %v281, 16
      %v288 = vor.u32 %v285, %v286
      %vm290 = vcmask 1040384
      %vm291 = vsmask.f32 256
      %vm292 = vmand %vm290, %vm291
      %v293 = vsel %vm292, 0, %v288
      %v294 = vrot.slane %v286, 1
      %v295 = vor.u32 %v283, %v294
      %vm297 = vcmask 1047552
      %vm298 = vsmask.f32 7424
      %vm299 = vmand %vm297, %vm298
      %v300 = vsel %vm299, %v295, 0
      %301 = vrot.lane.b32.xlu0 %v281, 4
      %v302 = vpop.permute.xlu0 %301
      %304 = vrot.lane.b32.xlu0 %v300, 8
      %v305 = vpop.permute.xlu0 %304
      %vm306 = vcmask 31744
      %v309 = vsel %vm306, %v293, %v302
      %vm310 = vcmask 64512
      %v312 = vsel %vm310, %v309, %v305
      %v315 = vunpack.c.l.b16 %v275
      %v316 = vunpack.c.l.b16 %v276
      %v317 = vpack.c.b16 %v316, %v315
      %vm318 = vcmask 97280
      %v319 = vsel %vm318, %v312, 0
      %vm321 = vcmask 1045504
      %v323 = vsel %vm321, %v317, 0
      %325 = vmatpush.bf16.msra.mxu0 0
      %326 = vmatpush.bf16.msra.mxu0 0
      %327 = vmatpush.bf16.msra.mxu0 0
      %328 = vmatpush.bf16.msra.mxu0 0
      %329 = vmatpush.bf16.msra.mxu0 0
      %330 = vmatpush.bf16.msra.mxu0 0
      %331 = vmatpush.bf16.msra.mxu0 0
      %332 = vmatpush.bf16.msra.mxu0 %v323
      %333 = vmatmul.bf16.gmra.mxu0 %v319
      %v334 = vpop.f32.mrf.mxu0
      %v335 = vadd.f32 0.0, %v334
      %v336 = vpop.f32.mrf.mxu0
      %v337 = vadd.f32 0.0, %v336
      %338 = vdwg.mxu0
      %v339 = vpack.c.bf16 %v335, %v335
      %v340 = vpack.c.bf16 %v337, %v337
      %vm341 = vcmask 27648
      %342 = vst.msk [vmem:[%s246] sm:$0xf] %vm341, %v339
      %343 = vst.msk [vmem:[%s246 + $0x4] sm:$0xf] %vm341, %v340
      %v344 = vld [vmem:[%s5] sm:$0x1]
      %v345 = vsel %vm306, %v335, 0.0
      %v346 = vsel %vm306, %v337, 0.0
      %v347 = vadd.f32 %v345, %v346
      %v348 = vrot.slane %v347, 4
      %v349 = vadd.f32 %v347, %v348
      %v350 = vrot.slane %v349, 2
      %v351 = vadd.f32 %v349, %v350
      %v352 = vrot.slane %v351, 1
      %v353 = vadd.f32 %v351, %v352
      %v354 = vadd.f32 %v344, %v353
      %vm355 = vcmask 24576
      %356 = vst.msk [vmem:[%s5] sm:$0x1] %vm355, %v354
      %v357 = vld [vmem:[%s6] sm:$0x1]
      %v358 = vmul.f32 %v335, %v335
      %v359 = vmul.f32 %v337, %v337
      %v360 = vsel %vm306, %v358, 0.0
      %v361 = vsel %vm306, %v359, 0.0
      %v362 = vadd.f32 %v360, %v361
      %v363 = vrot.slane %v362, 4
      %v364 = vadd.f32 %v362, %v363
      %v365 = vrot.slane %v364, 2
      %v366 = vadd.f32 %v364, %v365
      %v367 = vrot.slane %v366, 1
      %v368 = vadd.f32 %v366, %v367
      %v369 = vadd.f32 %v357, %v368
      %370 = vst.msk [vmem:[%s6] sm:$0x1] %vm355, %v369
      %p371 = scmp.lt.s32.totalorder %s18, 1
      %s372 = scalar_select %p371, %s18, 1
      %s373 = smul.addr %s372, 2
      %s374 = smul.addr %s373, 4
      %s375 = scalar_lea.vmem %s4, %s374
      // Predicated region
      $region41: #{resnet_block.5} parent=35 // pred_check
        %p376 = pneg %p125
      $region42: #{resnet_block.5} parent=35 // pred_check_branch
        %378 = sbr.rel (%p376) target = $region44
      $region43: #{resnet_block.5} parent=35 // pred_region
        _
      $region44: #{resnet_block.5} parent=35 // pred_fallthru
        _
      // Predicated region
      $region45: #{resnet_block.5} parent=35 // pred_check
        %p379 = pneg %p146
      $region46: #{resnet_block.5} parent=35 // pred_check_branch
        %381 = sbr.rel (%p379) target = $region48
      $region47: #{resnet_block.5} parent=35 // pred_region
        _
      $region48: #{resnet_block.5} parent=35 // pred_fallthru
        _
      // Predicated region
      $region49: #{resnet_block.5} parent=35 // pred_check
        %p382 = pneg %p167
      $region50: #{resnet_block.5} parent=35 // pred_check_branch
        %384 = sbr.rel (%p382) target = $region52
      $region51: #{resnet_block.5} parent=35 // pred_region
        _
      $region52: #{resnet_block.5} parent=35 // pred_fallthru
        _
      // Predicated region
      $region53: #{resnet_block.5} parent=35 // pred_check
        %p385 = pneg %p146
      $region54: #{resnet_block.5} parent=35 // pred_check_branch
        %387 = sbr.rel (%p385) target = $region56
      $region55: #{resnet_block.5} parent=35 // pred_region
        _
      $region56: #{resnet_block.5} parent=35 // pred_fallthru
        _
      // Predicated region
      $region57: #{resnet_block.5} parent=35 // pred_check
        %p388 = pneg %p167
      $region58: #{resnet_block.5} parent=35 // pred_check_branch
        %390 = sbr.rel (%p388) target = $region60
      $region59: #{resnet_block.5} parent=35 // pred_region
        _
      $region60: #{resnet_block.5} parent=35 // pred_fallthru
        _
    $region36: #{resnet_block.5} parent=5 // pred_fallthru
      _
    %p391 = scmp.le.s32.totalorder 2, %s13
    // Predicated region
    $region61: #{resnet_block.5} parent=5 // pred_check
      %p392 = pneg %p391
    $region62: #{resnet_block.5} parent=5 // pred_check_branch
      %394 = sbr.rel (%p392) target = $region64
    $region63: #{resnet_block.5} parent=5 // pred_region
      %s395 = ssub.s32 %s13, 2
      // Predicated region
      $region65: #{resnet_block.5} parent=63 // pred_check
        %p396 = pneg %p131
      $region66: #{resnet_block.5} parent=63 // pred_check_branch
        %398 = sbr.rel (%p396) target = $region68
      $region67: #{resnet_block.5} parent=63 // pred_region
        %p399 = scmp.lt.s32.totalorder %s19, 1
        %s400 = scalar_select %p399, %s19, 1
        %s401 = smul.addr %s400, 2
        %s402 = smul.addr %s401, 4
        %s403 = scalar_lea.vmem %s4, %s402
      $region68: #{resnet_block.5} parent=63 // pred_fallthru
        _
    $region64: #{resnet_block.5} parent=5 // pred_fallthru
      _
  $region6: #{resnet_block.5} parent=0 // loop_footer
    %s17 = sadd.s32 1, %s13
  $region7: #{resnet_block.5} parent=0 // loop_footer_branch
    %12 = sbr.rel target = $region3
  $region8: #{resnet_block.5} parent=0 // loop_exit
    _

// kernel: resnet_block.4
$region0: #{resnet_block.4}
  #allocation0 [shape = 'u32[]', space=smem, size = 0x4, offset = 0x4, fixed_abs, tag = 'smem constant byte address 0x4 - core index']
  #allocation1 [shape = 'u32[72,128]{1,0:T(1,128)}', space=vmem, size = 0x9000, scoped, tag = 'internal scratch']
  %s0 = inlined_call_operand.vmem [shape: f32[1,1,4], index: 0, kind: input, shape index: {}]
  %s1 = inlined_call_operand.vmem [shape: f32[1,1,4], index: 1, kind: input, shape index: {}]
  %s2 = inlined_call_operand.vmem [shape: f32[2,4,16], index: 2, kind: input, shape index: {}]
  %s3 = inlined_call_operand.vmem [shape: bf16[12,4], index: 3, kind: input, shape index: {}]
  %s4 = inlined_call_operand.vmem [shape: bf16[2,16,4], index: 4, kind: output, shape index: {0}]
  %s5 = inlined_call_operand.vmem [shape: f32[1,1,4], index: 5, kind: output, shape index: {1}]
  %s6 = inlined_call_operand.vmem [shape: f32[1,1,4], index: 6, kind: output, shape index: {2}]
  %7 = xla_tuple %s4, %s5, %s6
  %s8 = sld [smem:[#allocation0]]
  $region69: #{resnet_block.4} parent=0
    _
  %s10 = ssub.s32 1, %s8
  %s11 = scalar_select 0, %s10, %s8
  loop: start=0, step=1, limit=4
  $region2: #{resnet_block.4} parent=0 // loop_pre_header
    _
  $region3: #{resnet_block.4} parent=0 // loop_header
    %s13 = sphi 0, %s17
    %p14 = scmp.ge.s32.totalorder %s13, 4
    %s21 = sphi 0, %s21
    %s23 = sphi 0, %s21
    %s24 = sphi 0, %s23
    %s38 = sphi 0, %s24
    %s42 = sphi 0, %s42
    %s44 = sphi 0, %s42
    %s45 = sphi 0, %s44
    %s59 = sphi 0, %s45
    %s65 = sphi 0, %s67
    %s68 = sphi 0, %s65
    %s69 = sphi 0, %s68
    %s85 = sphi 0, %s69
    %s89 = sphi 0, %s89
    %s91 = sphi 0, %s89
    %s92 = sphi 0, %s91
    %s106 = sphi 0, %s92
    %s112 = sphi 0, %s114
    %s115 = sphi 0, %s112
    %s116 = sphi 0, %s115
    %s132 = sphi 0, %s116
    %s136 = sphi 0, %s136
    %s138 = sphi 0, %s136
    %s139 = sphi 0, %s138
    %s153 = sphi 0, %s139
    %s157 = sphi 0, %s157
    %s159 = sphi 0, %s157
    %s160 = sphi 0, %s159
    %s174 = sphi 0, %s160
  $region4: #{resnet_block.4} parent=0 // loop_header_branch
    %16 = sbr.rel (%p14) target = $region8
  $region5: #{resnet_block.4} parent=0 // loop_body
    %s18 = ssub.s32 %s13, 1
    %s19 = ssub.s32 %s13, 2
    %s20 = sadd.s32 %s13, 1
    %s22 = sadd.s32 %s21, 1
    %p25 = scmp.eq.s32.totalorder %s13, 1
    %p26 = scmp.ne.s32.totalorder %s21, %s23
    %p27 = scmp.eq.s32.totalorder %s13, 0
    %p28 = por %p26, %p27
    %p29 = scmp.ne.s32.totalorder %s21, %s23
    %p30 = scmp.eq.s32.totalorder %s18, 1
    %p31 = por %p29, %p30
    %p32 = scmp.ne.s32.totalorder %s23, %s24
    %p33 = scmp.eq.s32.totalorder %s18, 0
    %p34 = por %p32, %p33
    %p35 = scmp.ne.s32.totalorder %s23, %s24
    %p36 = scmp.eq.s32.totalorder %s19, 1
    %p37 = por %p35, %p36
    %p39 = scmp.ne.s32.totalorder %s24, %s38
    %p40 = scmp.eq.s32.totalorder %s19, 0
    %p41 = por %p39, %p40
    %s43 = sadd.s32 %s42, 1
    %p46 = scmp.eq.s32.totalorder %s13, 1
    %p47 = scmp.ne.s32.totalorder %s42, %s44
    %p48 = scmp.eq.s32.totalorder %s13, 0
    %p49 = por %p47, %p48
    %p50 = scmp.ne.s32.totalorder %s42, %s44
    %p51 = scmp.eq.s32.totalorder %s18, 1
    %p52 = por %p50, %p51
    %p53 = scmp.ne.s32.totalorder %s44, %s45
    %p54 = scmp.eq.s32.totalorder %s18, 0
    %p55 = por %p53, %p54
    %p56 = scmp.ne.s32.totalorder %s44, %s45
    %p57 = scmp.eq.s32.totalorder %s19, 1
    %p58 = por %p56, %p57
    %p60 = scmp.ne.s32.totalorder %s45, %s59
    %p61 = scmp.eq.s32.totalorder %s19, 0
    %p62 = por %p60, %p61
    %s63 = ssub.s32 %s13, %s20
    %p64 = scmp.eq.s32.totalorder %s63, 0
    %s66 = sadd.s32 %s65, 1
    %s67 = scalar_select %p64, %s65, %s66
    %p70 = pneg %p64
    %p71 = scmp.eq.s32.totalorder %s13, 1
    %p72 = por %p70, %p71
    %p73 = scmp.ne.s32.totalorder %s65, %s68
    %p74 = scmp.eq.s32.totalorder %s13, 0
    %p75 = por %p73, %p74
    %p76 = scmp.ne.s32.totalorder %s65, %s68
    %p77 = scmp.eq.s32.totalorder %s18, 1
    %p78 = por %p76, %p77
    %p79 = scmp.ne.s32.totalorder %s68, %s69
    %p80 = scmp.eq.s32.totalorder %s18, 0
    %p81 = por %p79, %p80
    %p82 = scmp.ne.s32.totalorder %s68, %s69
    %p83 = scmp.eq.s32.totalorder %s19, 1
    %p84 = por %p82, %p83
    %p86 = scmp.ne.s32.totalorder %s69, %s85
    %p87 = scmp.eq.s32.totalorder %s19, 0
    %p88 = por %p86, %p87
    %s90 = sadd.s32 %s89, 1
    %p93 = scmp.eq.s32.totalorder %s13, 1
    %p94 = scmp.ne.s32.totalorder %s89, %s91
    %p95 = scmp.eq.s32.totalorder %s13, 0
    %p96 = por %p94, %p95
    %p97 = scmp.ne.s32.totalorder %s89, %s91
    %p98 = scmp.eq.s32.totalorder %s18, 1
    %p99 = por %p97, %p98
    %p100 = scmp.ne.s32.totalorder %s91, %s92
    %p101 = scmp.eq.s32.totalorder %s18, 0
    %p102 = por %p100, %p101
    %p103 = scmp.ne.s32.totalorder %s91, %s92
    %p104 = scmp.eq.s32.totalorder %s19, 1
    %p105 = por %p103, %p104
    %p107 = scmp.ne.s32.totalorder %s92, %s106
    %p108 = scmp.eq.s32.totalorder %s19, 0
    %p109 = por %p107, %p108
    %s110 = ssub.s32 %s13, %s20
    %p111 = scmp.eq.s32.totalorder %s110, 0
    %s113 = sadd.s32 %s112, 1
    %s114 = scalar_select %p111, %s112, %s113
    %p117 = pneg %p111
    %p118 = scmp.eq.s32.totalorder %s13, 1
    %p119 = por %p117, %p118
    %p120 = scmp.ne.s32.totalorder %s112, %s115
    %p121 = scmp.eq.s32.totalorder %s13, 0
    %p122 = por %p120, %p121
    %p123 = scmp.ne.s32.totalorder %s112, %s115
    %p124 = scmp.eq.s32.totalorder %s18, 1
    %p125 = por %p123, %p124
    %p126 = scmp.ne.s32.totalorder %s115, %s116
    %p127 = scmp.eq.s32.totalorder %s18, 0
    %p128 = por %p126, %p127
    %p129 = scmp.ne.s32.totalorder %s115, %s116
    %p130 = scmp.eq.s32.totalorder %s19, 1
    %p131 = por %p129, %p130
    %p133 = scmp.ne.s32.totalorder %s116, %s132
    %p134 = scmp.eq.s32.totalorder %s19, 0
    %p135 = por %p133, %p134
    %s137 = sadd.s32 %s136, 1
    %p140 = scmp.eq.s32.totalorder %s13, 1
    %p141 = scmp.ne.s32.totalorder %s136, %s138
    %p142 = scmp.eq.s32.totalorder %s13, 0
    %p143 = por %p141, %p142
    %p144 = scmp.ne.s32.totalorder %s136, %s138
    %p145 = scmp.eq.s32.totalorder %s18, 1
    %p146 = por %p144, %p145
    %p147 = scmp.ne.s32.totalorder %s138, %s139
    %p148 = scmp.eq.s32.totalorder %s18, 0
    %p149 = por %p147, %p148
    %p150 = scmp.ne.s32.totalorder %s138, %s139
    %p151 = scmp.eq.s32.totalorder %s19, 1
    %p152 = por %p150, %p151
    %p154 = scmp.ne.s32.totalorder %s139, %s153
    %p155 = scmp.eq.s32.totalorder %s19, 0
    %p156 = por %p154, %p155
    %s158 = sadd.s32 %s157, 1
    %p161 = scmp.eq.s32.totalorder %s13, 1
    %p162 = scmp.ne.s32.totalorder %s157, %s159
    %p163 = scmp.eq.s32.totalorder %s13, 0
    %p164 = por %p162, %p163
    %p165 = scmp.ne.s32.totalorder %s157, %s159
    %p166 = scmp.eq.s32.totalorder %s18, 1
    %p167 = por %p165, %p166
    %p168 = scmp.ne.s32.totalorder %s159, %s160
    %p169 = scmp.eq.s32.totalorder %s18, 0
    %p170 = por %p168, %p169
    %p171 = scmp.ne.s32.totalorder %s159, %s160
    %p172 = scmp.eq.s32.totalorder %s19, 1
    %p173 = por %p171, %p172
    %p175 = scmp.ne.s32.totalorder %s160, %s174
    %p176 = scmp.eq.s32.totalorder %s19, 0
    %p177 = por %p175, %p176
    %p178 = scmp.le.s32.totalorder 1, %s13
    %p179 = scmp.lt.s32.totalorder %s13, 3
    %p180 = pnand %p178, %p179
    %p181 = pneg %p180
    // Predicated region
    $region9: #{resnet_block.4} parent=5 // pred_check
      _
    $region10: #{resnet_block.4} parent=5 // pred_check_branch
      %183 = sbr.rel (%p180) target = $region12
    $region11: #{resnet_block.4} parent=5 // pred_region
      %s184 = ssub.s32 %s13, 1
      // Predicated region
      $region13: #{resnet_block.4} parent=11 // pred_check
        %p185 = pneg %p34
      $region14: #{resnet_block.4} parent=11 // pred_check_branch
        %187 = sbr.rel (%p185) target = $region16
      $region15: #{resnet_block.4} parent=11 // pred_region
        _
      $region16: #{resnet_block.4} parent=11 // pred_fallthru
        _
      // Predicated region
      $region17: #{resnet_block.4} parent=11 // pred_check
        %p188 = pneg %p55
      $region18: #{resnet_block.4} parent=11 // pred_check_branch
        %190 = sbr.rel (%p188) target = $region20
      $region19: #{resnet_block.4} parent=11 // pred_region
        _
      $region20: #{resnet_block.4} parent=11 // pred_fallthru
        _
      // Predicated region
      $region21: #{resnet_block.4} parent=11 // pred_check
        %p191 = pneg %p102
      $region22: #{resnet_block.4} parent=11 // pred_check_branch
        %193 = sbr.rel (%p191) target = $region24
      $region23: #{resnet_block.4} parent=11 // pred_region
        _
      $region24: #{resnet_block.4} parent=11 // pred_fallthru
        _
    $region12: #{resnet_block.4} parent=5 // pred_fallthru
      _
    %p194 = scmp.lt.s32.totalorder %s13, 2
    // Predicated region
    $region25: #{resnet_block.4} parent=5 // pred_check
      %p195 = pneg %p194
    $region26: #{resnet_block.4} parent=5 // pred_check_branch
      %197 = sbr.rel (%p195) target = $region28
    $region27: #{resnet_block.4} parent=5 // pred_region
      // Predicated region
      $region29: #{resnet_block.4} parent=27 // pred_check
        %p198 = pneg %p75
      $region30: #{resnet_block.4} parent=27 // pred_check_branch
        %200 = sbr.rel (%p198) target = $region32
      $region31: #{resnet_block.4} parent=27 // pred_region
        %p201 = scmp.lt.s32.totalorder %s13, 1
        %s202 = scalar_select %p201, %s13, 1
        %s203 = smul.addr %s202, 4
        %s204 = scalar_lea.vmem %s2, %s203
      $region32: #{resnet_block.4} parent=27 // pred_fallthru
        _
    $region28: #{resnet_block.4} parent=5 // pred_fallthru
      _
    %p205 = scmp.le.s32.totalorder 1, %s13
    %p206 = scmp.lt.s32.totalorder %s13, 3
    %p207 = pnand %p205, %p206
    %p208 = pneg %p207
    // Predicated region
    $region33: #{resnet_block.4} parent=5 // pred_check
      _
    $region34: #{resnet_block.4} parent=5 // pred_check_branch
      %210 = sbr.rel (%p207) target = $region36
    $region35: #{resnet_block.4} parent=5 // pred_region
      %s211 = ssub.s32 %s13, 1
      %p212 = pneg %p34
      %p213 = pneg %p31
      %p214 = pneg %p55
      %p215 = pneg %p52
      %p216 = scmp.lt.s32.totalorder %s18, 1
      %s217 = scalar_select %p216, %s18, 1
      %s218 = smul.addr %s217, 4
      %s219 = scalar_lea.vmem %s2, %s218
      %p220 = pneg %p81
      %p221 = pneg %p78
      %p222 = pneg %p102
      %p223 = pneg %p99
      %p224 = pneg %p128
      %p225 = pneg %p125
      %p226 = scmp.lt.s32.totalorder %s18, 1
      %s227 = scalar_select %p226, %s18, 1
      %s228 = smul.addr %s227, 2
      %s229 = smul.addr %s228, 4
      %s230 = scalar_lea.vmem %s4, %s229
      %p231 = pneg %p149
      %p232 = pneg %p146
      %p233 = pneg %p170
      %p234 = pneg %p167
      %p235 = scmp.lt.s32.totalorder %s18, 1
      %s236 = scalar_select %p235, %s18, 1
      %s237 = smul.addr %s236, 4
      %s238 = scalar_lea.vmem %s2, %s237
      %p239 = scmp.lt.s32.totalorder %s18, 1
      %s240 = scalar_select %p239, %s18, 1
      %s241 = smul.addr %s240, 2
      %s242 = smul.addr %s241, 4
      %s243 = scalar_lea.vmem %s4, %s242
      %p245 = scmp.eq.s32.totalorder %s18, 0
      // Predicated region
      $region37: #{resnet_block.4} parent=35 // pred_check
        %p246 = pneg %p245
      $region38: #{resnet_block.4} parent=35 // pred_check_branch
        %248 = sbr.rel (%p246) target = $region40
      $region39: #{resnet_block.4} parent=35 // pred_region
        %vm249 = vcmask 24576
        %250 = vst.msk [vmem:[%s5] sm:$0x1] %vm249, 0.0
        %251 = vst.msk [vmem:[%s6] sm:$0x1] %vm249, 0.0
      $region40: #{resnet_block.4} parent=35 // pred_fallthru
        _
      %v252 = vld [vmem:[%s238] sm:$0xf]
      %253 = vxpose.xlu0.b32.start [1/16] %v252, 128
      %254 = vxpose.xlu0.b32.cont [2/16] 0.0, 128
      %255 = vxpose.xlu0.b32.cont [3/16] 0.0, 128
      %256 = vxpose.xlu0.b32.cont [4/16] 0.0, 128
      %257 = vxpose.xlu0.b32.cont [5/16] 0.0, 128
      %258 = vxpose.xlu0.b32.cont [6/16] 0.0, 128
      %259 = vxpose.xlu0.b32.cont [7/16] 0.0, 128
      %260 = vxpose.xlu0.b32.cont [8/16] 0.0, 128
      %261 = vxpose.xlu0.b32.cont [9/16] 0.0, 128
      %262 = vxpose.xlu0.b32.cont [10/16] 0.0, 128
      %263 = vxpose.xlu0.b32.cont [11/16] 0.0, 128
      %264 = vxpose.xlu0.b32.cont [12/16] 0.0, 128
      %265 = vxpose.xlu0.b32.cont [13/16] 0.0, 128
      %266 = vxpose.xlu0.b32.cont [14/16] 0.0, 128
      %267 = vxpose.xlu0.b32.cont [15/16] 0.0, 128
      %268 = vxpose.xlu0.b32.end [16/16] 0.0, 128
      %v269 = vpop.trf.xlu0
      %v270 = vpop.trf.xlu0
      %v271 = vpop.trf.xlu0
      %v272 = vpop.trf.xlu0
      %v273 = vpop.trf.xlu0
      %v274 = vpop.trf.xlu0
      %v275 = vpop.trf.xlu0
      %v276 = vpop.trf.xlu0
      %v277 = vpop.trf.xlu0
      %v278 = vpop.trf.xlu0
      %v279 = vpop.trf.xlu0
      %v280 = vpop.trf.xlu0
      %v281 = vpop.trf.xlu0
      %v282 = vpop.trf.xlu0
      %v283 = vpop.trf.xlu0
      %v284 = vpop.trf.xlu0
      %v285 = vpack.c.bf16 %v269, %v269
      %v286 = vpack.c.bf16 %v270, %v270
      %v287 = vld [vmem:[%s3] sm:$0xf]
      %v288 = vld [vmem:[%s3 + $0x4] sm:$0x3]
      %v291 = vunpack.c.l.b16 %v285
      %v292 = vunpack.c.l.b16 %v286
      %v293 = vpack.c.b16 %v292, %v291
      %v295 = vshrl.u32 %v293, 16
      %v297 = vrot.slane %v295, 7
      %v298 = vshll.u32 %v293, 16
      %v300 = vor.u32 %v297, %v298
      %vm302 = vcmask 1040384
      %vm303 = vsmask.f32 256
      %vm304 = vmand %vm302, %vm303
      %v305 = vsel %vm304, 0, %v300
      %v306 = vrot.slane %v298, 1
      %v307 = vor.u32 %v295, %v306
      %vm309 = vcmask 1047552
      %vm310 = vsmask.f32 7424
      %vm311 = vmand %vm309, %vm310
      %v312 = vsel %vm311, %v307, 0
      %313 = vrot.lane.b32.xlu0 %v293, 4
      %v314 = vpop.permute.xlu0 %313
      %316 = vrot.lane.b32.xlu0 %v312, 8
      %v317 = vpop.permute.xlu0 %316
      %vm318 = vcmask 31744
      %v321 = vsel %vm318, %v305, %v314
      %vm322 = vcmask 64512
      %v324 = vsel %vm322, %v321, %v317
      %v327 = vunpack.c.l.b16 %v287
      %v328 = vunpack.c.l.b16 %v288
      %v329 = vpack.c.b16 %v328, %v327
      %vm330 = vcmask 97280
      %v331 = vsel %vm330, %v324, 0
      %vm333 = vcmask 1045504
      %v335 = vsel %vm333, %v329, 0
      %337 = vmatpush.bf16.msra.mxu0 0
      %338 = vmatpush.bf16.msra.mxu0 0
      %339 = vmatpush.bf16.msra.mxu0 0
      %340 = vmatpush.bf16.msra.mxu0 0
      %341 = vmatpush.bf16.msra.mxu0 0
      %342 = vmatpush.bf16.msra.mxu0 0
      %343 = vmatpush.bf16.msra.mxu0 0
      %344 = vmatpush.bf16.msra.mxu0 %v335
      %345 = vmatmul.bf16.gmra.mxu0 %v331
      %v346 = vpop.f32.mrf.mxu0
      %v347 = vadd.f32 0.0, %v346
      %v348 = vpop.f32.mrf.mxu0
      %v349 = vadd.f32 0.0, %v348
      %350 = vdwg.mxu0
      %v351 = vpack.c.bf16 %v347, %v347
      %v352 = vpack.c.bf16 %v349, %v349
      %vm353 = vcmask 27648
      %354 = vst.msk [vmem:[%s243] sm:$0xf] %vm353, %v351
      %355 = vst.msk [vmem:[%s243 + $0x4] sm:$0xf] %vm353, %v352
      %v356 = vld [vmem:[%s5] sm:$0x1]
      %v357 = vsel %vm318, %v347, 0.0
      %v358 = vsel %vm318, %v349, 0.0
      %v359 = vadd.f32 %v357, %v358
      %v360 = vrot.slane %v359, 4
      %v361 = vadd.f32 %v359, %v360
      %v362 = vrot.slane %v361, 2
      %v363 = vadd.f32 %v361, %v362
      %v364 = vrot.slane %v363, 1
      %v365 = vadd.f32 %v363, %v364
      %v366 = vadd.f32 %v356, %v365
      %vm367 = vcmask 24576
      %368 = vst.msk [vmem:[%s5] sm:$0x1] %vm367, %v366
      %v369 = vld [vmem:[%s6] sm:$0x1]
      %v370 = vmul.f32 %v347, %v347
      %v371 = vmul.f32 %v349, %v349
      %v372 = vsel %vm318, %v370, 0.0
      %v373 = vsel %vm318, %v371, 0.0
      %v374 = vadd.f32 %v372, %v373
      %v375 = vrot.slane %v374, 4
      %v376 = vadd.f32 %v374, %v375
      %v377 = vrot.slane %v376, 2
      %v378 = vadd.f32 %v376, %v377
      %v379 = vrot.slane %v378, 1
      %v380 = vadd.f32 %v378, %v379
      %v381 = vadd.f32 %v369, %v380
      %382 = vst.msk [vmem:[%s6] sm:$0x1] %vm367, %v381
      %p383 = scmp.lt.s32.totalorder %s18, 1
      %s384 = scalar_select %p383, %s18, 1
      %s385 = smul.addr %s384, 2
      %s386 = smul.addr %s385, 4
      %s387 = scalar_lea.vmem %s4, %s386
      // Predicated region
      $region41: #{resnet_block.4} parent=35 // pred_check
        %p388 = pneg %p125
      $region42: #{resnet_block.4} parent=35 // pred_check_branch
        %390 = sbr.rel (%p388) target = $region44
      $region43: #{resnet_block.4} parent=35 // pred_region
        _
      $region44: #{resnet_block.4} parent=35 // pred_fallthru
        _
      // Predicated region
      $region45: #{resnet_block.4} parent=35 // pred_check
        %p391 = pneg %p146
      $region46: #{resnet_block.4} parent=35 // pred_check_branch
        %393 = sbr.rel (%p391) target = $region48
      $region47: #{resnet_block.4} parent=35 // pred_region
        _
      $region48: #{resnet_block.4} parent=35 // pred_fallthru
        _
      // Predicated region
      $region49: #{resnet_block.4} parent=35 // pred_check
        %p394 = pneg %p167
      $region50: #{resnet_block.4} parent=35 // pred_check_branch
        %396 = sbr.rel (%p394) target = $region52
      $region51: #{resnet_block.4} parent=35 // pred_region
        _
      $region52: #{resnet_block.4} parent=35 // pred_fallthru
        _
      // Predicated region
      $region53: #{resnet_block.4} parent=35 // pred_check
        %p397 = pneg %p146
      $region54: #{resnet_block.4} parent=35 // pred_check_branch
        %399 = sbr.rel (%p397) target = $region56
      $region55: #{resnet_block.4} parent=35 // pred_region
        _
      $region56: #{resnet_block.4} parent=35 // pred_fallthru
        _
      // Predicated region
      $region57: #{resnet_block.4} parent=35 // pred_check
        %p400 = pneg %p167
      $region58: #{resnet_block.4} parent=35 // pred_check_branch
        %402 = sbr.rel (%p400) target = $region60
      $region59: #{resnet_block.4} parent=35 // pred_region
        _
      $region60: #{resnet_block.4} parent=35 // pred_fallthru
        _
    $region36: #{resnet_block.4} parent=5 // pred_fallthru
      _
    %p403 = scmp.le.s32.totalorder 2, %s13
    // Predicated region
    $region61: #{resnet_block.4} parent=5 // pred_check
      %p404 = pneg %p403
    $region62: #{resnet_block.4} parent=5 // pred_check_branch
      %406 = sbr.rel (%p404) target = $region64
    $region63: #{resnet_block.4} parent=5 // pred_region
      %s407 = ssub.s32 %s13, 2
      // Predicated region
      $region65: #{resnet_block.4} parent=63 // pred_check
        %p408 = pneg %p131
      $region66: #{resnet_block.4} parent=63 // pred_check_branch
        %410 = sbr.rel (%p408) target = $region68
      $region67: #{resnet_block.4} parent=63 // pred_region
        %p411 = scmp.lt.s32.totalorder %s19, 1
        %s412 = scalar_select %p411, %s19, 1
        %s413 = smul.addr %s412, 2
        %s414 = smul.addr %s413, 4
        %s415 = scalar_lea.vmem %s4, %s414
      $region68: #{resnet_block.4} parent=63 // pred_fallthru
        _
    $region64: #{resnet_block.4} parent=5 // pred_fallthru
      _
  $region6: #{resnet_block.4} parent=0 // loop_footer
    %s17 = sadd.s32 1, %s13
  $region7: #{resnet_block.4} parent=0 // loop_footer_branch
    %12 = sbr.rel target = $region3
  $region8: #{resnet_block.4} parent=0 // loop_exit
    _

</llo_original>
